<compile_context>
chip_gen: v5e
topology: v5e:2x2
jax: 0.10.0
libtpu: 0.0.40
codegen_flags: <defaults>
</compile_context>

<pallas_src>
import jax
import jax.numpy as jnp
from jax.experimental import pallas as pl
from jax.experimental.pallas import tpu as pltpu


LN1_TK = 15488           # 121 * 128: 4 K-tiles over the padded K = 61952
LN1_TM = 256             # output split 500 -> 512 = 2 x 256 ("parallel", megacore)
LN1_KP = 4 * LN1_TK      # 61952 >= 61504


def _cdiv(a, b):
    return -(-a // b)


def _mxu_width():
    """256-wide dots on v6e/v7x, 128-wide on v5e and older (128x128 MXUs)."""
    try:
        kind = jax.devices()[0].device_kind.lower()
    except Exception:
        return 256
    if any(t in kind for t in ("v2", "v3", "v4", "v5")):
        return 128
    return 256


# -----------------------------------------------------------------------------
# Fused Conv2d(4x4, stride 1, pad 1) + ReLU + MaxPool2d(2,2)
# -----------------------------------------------------------------------------
def _build_block_toeplitz(w_hwio, B):
    """(4,4,cin,cout) -> (2 col-parity, 4*(B+3)*cin, (B//2)*cout) bf16.

    Entry [cp, kh*KL + d*cin+ci, j*cout+co] = w[kh, d-(2j+cp), ci, co] when the offset
    is a valid kw tap, else 0.  One dot against a (rows, 4*(B+3)*cin) input window
    (the 4 kh-shifted row windows concatenated along K) therefore produces B//2 pooled
    column candidates of parity cp in a single MXU pass (all taps folded into K).
    """
    kh_, kw_, cin, cout = w_hwio.shape
    nwin = B + kw_ - 1
    d = jnp.arange(nwin)[:, None]
    j = jnp.arange(B // 2)[None, :]
    per_cp = []
    for cp in (0, 1):
        kwidx = d - (2 * j + cp)                       # (nwin, B//2)
        valid = (kwidx >= 0) & (kwidx < kw_)
        kwc = jnp.clip(kwidx, 0, kw_ - 1)
        g = w_hwio[:, kwc, :, :]                       # (kh, nwin, B//2, cin, cout)
        g = g * valid[None, :, :, None, None]
        g = jnp.transpose(g, (0, 1, 3, 2, 4))          # (kh, d, ci, j, co)
        per_cp.append(g.reshape(kh_, nwin * cin, (B // 2) * cout))
    wt = jnp.stack(per_cp, axis=0)                     # (cp, kh, KL, NL)
    return wt.reshape(2, kh_ * nwin * cin, (B // 2) * cout).astype(jnp.bfloat16)


def conv_relu_pool(act, w_hwio, b):
    """act: (N, H, W*cin) bf16 -> (N, ho, wo*cout) bf16 (conv + ReLU + 2x2 maxpool)."""
    n, h, wcin = act.shape
    kh_, kw_, cin, cout = w_hwio.shape
    w_sp = wcin // cin
    hout, wout = h - 1, w_sp - 1          # 4x4 conv, stride 1, pad 1
    ho, wo = hout // 2, wout // 2         # floor-mode 2x2 pool

    jpb = max(1, _mxu_width() // cout)    # pooled columns per block -> NL = MXU width
    B = 2 * jpb                           # conv columns per block
    wo_pad = _cdiv(wo, jpb) * jpb
    nb = wo_pad // jpb                    # column blocks per image
    ncs = 2 if nb % 2 == 0 else 1         # split blocks over a 2nd parallel grid axis
    nbh = nb // ncs
    KL = (B + kw_ - 1) * cin              # contraction per kh tap
    K4 = kh_ * KL                         # all taps folded into one dot
    NL = jpb * cout

    # Zero padding: one spatial row top/bottom, one spatial column left, plus enough
    # zero columns on the right so every (padded) column block reads valid zeros.
    need_cols = 2 * wo_pad + kw_ - 1
    xp = jnp.pad(act, ((0, 0), (1, 1), (cin, (need_cols - w_sp - 1) * cin)))

    # Wrapper-side gather: x4[n, rp, blk, pr, kh*KL + t] = xp[n, 2*pr+rp+kh, blk*B*cin + t].
    # ~4x redundant copy of a small activation so every in-kernel dot is one dense
    # (ho, K4) x (K4, NL) matmul with no strided loads and 4x fewer vmatmul issues.
    rowsets = []
    for rp in range(2):
        taps = [xp[:, rp + kh: rp + kh + 2 * ho: 2, :] for kh in range(kh_)]
        rowsets.append(jnp.stack(taps, axis=1))        # (n, kh, ho, Wc)
    xg = jnp.stack(rowsets, axis=1)                     # (n, rp, kh, ho, Wc)
    xb = jnp.stack([xg[..., bb * B * cin: bb * B * cin + KL] for bb in range(nb)],
                   axis=2)                              # (n, rp, blk, kh, ho, KL)
    xb = jnp.transpose(xb, (0, 1, 2, 4, 3, 5)).reshape(n, 2, nb, ho, K4)

    wt = _build_block_toeplitz(w_hwio, B)               # (2, K4, NL) bf16, VMEM-resident
    brow = jnp.tile(b.astype(jnp.float32), jpb).reshape(1, NL)

    def kernel(x_ref, wt_ref, b_ref, o_ref):
        # Hoisted bias broadcast (JAX does not CSE broadcast_in_dim per iteration).
        bias = jnp.broadcast_to(b_ref[...], (ho, NL))
        for blk in range(nbh):            # fully unrolled: LLO overlaps MXU & epilogue
            res = None
            for rp in range(2):           # pooled-row parity
                lhs = x_ref[0, rp, blk]   # (ho, K4)
                for cp in range(2):       # pooled-column parity
                    d = jnp.dot(lhs, wt_ref[cp], preferred_element_type=jnp.float32)
                    res = d if res is None else jnp.maximum(res, d)
            # bias-after-max + ReLU == pool(ReLU(conv+bias)): bias is per-channel
            # uniform over the pooling window and ReLU is monotone.
            res = jnp.maximum(res + bias, 0.0)
            o_ref[0, blk] = res.astype(o_ref.dtype)

    cost = pl.CostEstimate(
        flops=int(2 * n * nb * 4 * ho * K4 * NL),
        transcendentals=0,
        bytes_accessed=int(xb.size * 2 + wt.size * 2 + brow.size * 4
                           + n * nb * ho * NL * 2))

    out = pl.pallas_call(
        kernel,
        out_shape=jax.ShapeDtypeStruct((n, nb, ho, NL), jnp.bfloat16),
        grid=(n, ncs),
        in_specs=[
            pl.BlockSpec((1, 2, nbh, ho, K4), lambda i, c: (i, 0, c, 0, 0)),
            pl.BlockSpec(wt.shape, lambda i, c: (0, 0, 0)),     # resident weights
            pl.BlockSpec((1, NL), lambda i, c: (0, 0)),
        ],
        out_specs=pl.BlockSpec((1, nbh, ho, NL), lambda i, c: (i, c, 0, 0)),
        compiler_params=pltpu.CompilerParams(
            dimension_semantics=("parallel", "parallel")),
        cost_estimate=cost,
    )(xb, wt, brow)

    # Re-assemble lane-dense (N, ho, wo*cout); drop the padded pooled columns.
    out = jnp.transpose(out, (0, 2, 1, 3)).reshape(n, ho, nb * NL)
    return out[:, :, : wo * cout]


# -----------------------------------------------------------------------------
# ln1: Linear(61504 -> 500) + ReLU.  bf16 weight stream, f32 accumulation directly
# into the resident output block.  Grid = (output-split "parallel", K "arbitrary").
# -----------------------------------------------------------------------------
def linear_relu_pallas(x, w, b, *, tk=LN1_TK, tm=LN1_TM):
    n, k = x.shape
    m = w.shape[1]
    n_pad = max(8, _cdiv(n, 8) * 8)
    nk, nm = k // tk, m // tm
    xp = jnp.pad(x, ((0, n_pad - n), (0, 0)))

    def kernel(x_ref, w_ref, b_ref, o_ref):
        kk = pl.program_id(1)

        @pl.when(kk == 0)
        def _():
            o_ref[...] = jnp.zeros_like(o_ref)

        # Accumulate straight into the resident f32 output block (no scratch copy).
        o_ref[...] += jnp.dot(x_ref[...], w_ref[...],
                              preferred_element_type=jnp.float32)

        @pl.when(kk == pl.num_programs(1) - 1)
        def _():
            o_ref[...] = jnp.maximum(o_ref[...] + b_ref[...], 0.0)

    cost = pl.CostEstimate(
        flops=int(2 * n_pad * k * m),
        transcendentals=0,
        bytes_accessed=int(k * m * 2 + n_pad * k * 2 + n_pad * m * 4 + m * 4))

    return pl.pallas_call(
        kernel,
        out_shape=jax.ShapeDtypeStruct((n_pad, m), jnp.float32),
        grid=(nm, nk),
        in_specs=[
            pl.BlockSpec((n_pad, tk), lambda mi, ki: (0, ki)),
            pl.BlockSpec((tk, tm), lambda mi, ki: (ki, mi)),
            pl.BlockSpec((1, tm), lambda mi, ki: (0, mi)),
        ],
        out_specs=pl.BlockSpec((n_pad, tm), lambda mi, ki: (0, mi)),
        compiler_params=pltpu.CompilerParams(
            dimension_semantics=("parallel", "arbitrary"),
            vmem_limit_bytes=40 * 1024 * 1024),   # 2 x 7.9 MB weight tiles, dbl-buffered
        cost_estimate=cost,
    )(xp, w, b)


# -----------------------------------------------------------------------------
# Fused head: ln2 + ReLU, ln3, Softmax(dim=1).  Everything tiny, f32.
# -----------------------------------------------------------------------------
def head_pallas(h, w2, b2, w3, b3):
    n, k = h.shape
    hd = w2.shape[1]
    o = w3.shape[1]

    def kernel(x_ref, w2_ref, b2_ref, w3_ref, b3_ref, o_ref):
        hid = jnp.dot(x_ref[...], w2_ref[...], preferred_element_type=jnp.float32)
        hid = jnp.maximum(hid + b2_ref[...], 0.0)
        logits = jnp.dot(hid, w3_ref[...],
                         preferred_element_type=jnp.float32) + b3_ref[...]
        mx = jnp.max(logits, axis=1, keepdims=True)
        e = jnp.exp(logits - mx)
        o_ref[...] = e / jnp.sum(e, axis=1, keepdims=True)

    return pl.pallas_call(
        kernel,
        out_shape=jax.ShapeDtypeStruct((n, o), jnp.float32),
        grid=(1,),
        in_specs=[
            pl.BlockSpec((n, k), lambda i: (0, 0)),
            pl.BlockSpec((k, hd), lambda i: (0, 0)),
            pl.BlockSpec((1, hd), lambda i: (0, 0)),
            pl.BlockSpec((hd, o), lambda i: (0, 0)),
            pl.BlockSpec((1, o), lambda i: (0, 0)),
        ],
        out_specs=pl.BlockSpec((n, o), lambda i: (0, 0)),
    )(h, w2, b2, w3, b3)


# -----------------------------------------------------------------------------
# Parameters + forward pass, mirroring the PyTorch NeuralNet module.
# -----------------------------------------------------------------------------
def init_params(key, in_channels, out_channels):
    ks = jax.random.split(key, 12)

    def conv_p(kw_, kb_, cin, cout):
        return (jax.random.normal(kw_, (4, 4, cin, cout), jnp.float32) * 0.05,
                jax.random.normal(kb_, (cout,), jnp.float32) * 0.05)

    def lin_p(kw_, kb_, cin, cout):
        return (jax.random.normal(kw_, (cin, cout), jnp.float32) * (cin ** -0.5),
                jax.random.normal(kb_, (cout,), jnp.float32) * 0.05)

    params = {
        "conv1": conv_p(ks[0], ks[1], in_channels, 16),
        "conv2": conv_p(ks[2], ks[3], 16, 32),
        "conv3": conv_p(ks[4], ks[5], 32, 64),
        "ln2": lin_p(ks[8], ks[9], 500, 50),
        "ln3": lin_p(ks[10], ks[11], 50, out_channels),
    }
    # ln1 is the only big weight (61504 x 500): store it pre-padded to the kernel tiling
    # (K=61952, M=512) and in bfloat16, so each forward streams ~half the bytes with no
    # per-call cast/pad copies.  Accumulation stays f32 inside the kernel.
    K, M = 64 * 31 * 31, 500
    KP, MP = LN1_KP, 2 * LN1_TM
    w1 = jax.random.normal(ks[6], (K, M), jnp.float32) * (K ** -0.5)
    b1 = jax.random.normal(ks[7], (M,), jnp.float32) * 0.05
    w1p = jnp.zeros((KP, MP), jnp.bfloat16).at[:K, :M].set(w1.astype(jnp.bfloat16))
    b1p = jnp.zeros((1, MP), jnp.float32).at[0, :M].set(b1)
    params["ln1"] = (w1p, b1p)
    return params


def forward(params, x_nchw):
    n = x_nchw.shape[0]
    # NCHW -> lane-dense channels-last rows "(N, H, W*C)" used by the conv kernels.
    x = jnp.transpose(x_nchw, (0, 2, 3, 1)).astype(jnp.bfloat16)
    x = x.reshape(n, x.shape[1], -1)
    for name in ("conv1", "conv2", "conv3"):
        w, b = params[name]
        x = conv_relu_pool(x, w, b)            # Conv2d(4,1,1) + ReLU + MaxPool2d(2,2)
        # TODO(synk): nn.Dropout(0.2) is identity at inference; train-mode masking omitted.

    # Flatten in torch NCHW order (C-major) to match nn.Flatten on (N, 64, 31, 31).
    cout = params["conv3"][0].shape[-1]
    ho = x.shape[1]
    wo = x.shape[2] // cout
    x = x.reshape(n, ho, wo, cout)
    x = jnp.transpose(x, (0, 3, 1, 2)).reshape(n, cout * ho * wo)     # (N, 61504) bf16

    w1, b1 = params["ln1"]
    x = jnp.pad(x, ((0, 0), (0, w1.shape[0] - x.shape[1])))           # K -> 61952
    h1 = linear_relu_pallas(x, w1, b1)                                # (8, 512) f32, ReLU'd

    w2, b2 = params["ln2"]
    w3, b3 = params["ln3"]
    w2p = jnp.pad(w2, ((0, h1.shape[1] - w2.shape[0]), (0, 0)))       # zero rows for padded hidden
    out = head_pallas(h1, w2p, b2.reshape(1, -1), w3, b3.reshape(1, -1))
    return out[:n]


# -----------------------------------------------------------------------------
# Small numerical self-check of the fused conv kernel against lax.conv + reduce_window
# (bf16-rounded inputs, f32 reference) -- validates the block-Toeplitz / tap-fold math.
# -----------------------------------------------------------------------------
def _self_check_conv():
    k1, k2, k3 = jax.random.split(jax.random.PRNGKey(1), 3)
    x = jax.random.normal(k1, (1, 40, 40, 3), jnp.float32)
    w = jax.random.normal(k2, (4, 4, 3, 16), jnp.float32) * 0.1
    b = jax.random.normal(k3, (16,), jnp.float32) * 0.1
    xb = x.astype(jnp.bfloat16)
    got = conv_relu_pool(xb.reshape(1, 40, 40 * 3), w, b).astype(jnp.float32)
    ref = jax.lax.conv_general_dilated(
        xb.astype(jnp.float32), w.astype(jnp.bfloat16).astype(jnp.float32),
        (1, 1), ((1, 1), (1, 1)), dimension_numbers=("NHWC", "HWIO", "NHWC"))
    ref = jnp.maximum(ref + b, 0.0)
    ref = jax.lax.reduce_window(ref, -jnp.inf, jax.lax.max,
                                (1, 2, 2, 1), (1, 2, 2, 1), "VALID")
    ref = ref.reshape(got.shape)
    err = float(jnp.max(jnp.abs(got - ref)))
    assert bool(jnp.allclose(got, ref, atol=5e-2, rtol=5e-2)), err


if __name__ == "__main__":
    _self_check_conv()

    key = jax.random.PRNGKey(0)
    pkey, xkey = jax.random.split(key)
    params = init_params(pkey, in_channels=3, out_channels=10)
    # batch=2, in_channels=3; 256x256 spatial is dictated by ln1.in_features = 61504.
    x = jax.random.normal(xkey, (2, 3, 256, 256), jnp.float32)

    out = jax.jit(forward)(params, x)
    out = jax.block_until_ready(out)

    assert out.shape == (2, 10)
    assert bool(jnp.all(jnp.isfinite(out)))
    assert bool(jnp.allclose(jnp.sum(out, axis=1), 1.0, atol=1e-4))   # softmax rows
    print("KERNEL_OK")
</pallas_src>

<mosaic_0001>
module attributes {stable_mosaic.version = 11 : i64} {
  func.func @kernel(%arg0: i32, %arg1: i32, %arg2: memref<1x2x1x19x420xbf16, #tpu.memory_space<vmem>>, %arg3: memref<2x420x256xbf16, #tpu.memory_space<vmem>>, %arg4: memref<1x256xf32, #tpu.memory_space<vmem>>, %arg5: memref<1x1x19x256xbf16, #tpu.memory_space<vmem>>) attributes {dimension_semantics = [#tpu.dimension_semantics<parallel>, #tpu.dimension_semantics<parallel>], iteration_bounds = array<i64: 1, 2>, scalar_prefetch = 0 : i64, scratch_operands = 0 : i64, tpu.core_type = #tpu.core_type<tc>, window_params = [{transform_indices = @transform_0, window_bounds = array<i64: 1, 2, 1, 19, 420>}, {pipeline_mode = #tpu.pipeline_mode<synchronous>, transform_indices = @transform_1, window_bounds = array<i64: 2, 420, 256>}, {pipeline_mode = #tpu.pipeline_mode<synchronous>, transform_indices = @transform_2, window_bounds = array<i64: 1, 256>}, {transform_indices = @transform_3, window_bounds = array<i64: 1, 1, 19, 256>}]} {
    %c0 = arith.constant 0 : index
    %c0_0 = arith.constant 0 : index
    %0 = vector.load %arg4[%c0, %c0_0] : memref<1x256xf32, #tpu.memory_space<vmem>>, vector<1x256xf32>
    %1 = vector.shape_cast %0 : vector<1x256xf32> to vector<1x256xf32>
    %2 = vector.broadcast %1 : vector<1x256xf32> to vector<19x256xf32>
    %c0_1 = arith.constant 0 : index
    %c0_2 = arith.constant 0 : index
    %c0_3 = arith.constant 0 : index
    %c0_4 = arith.constant 0 : index
    %c0_5 = arith.constant 0 : index
    %3 = vector.load %arg2[%c0_1, %c0_2, %c0_3, %c0_4, %c0_5] : memref<1x2x1x19x420xbf16, #tpu.memory_space<vmem>>, vector<1x1x1x19x420xbf16>
    %4 = vector.shape_cast %3 : vector<1x1x1x19x420xbf16> to vector<19x420xbf16>
    %c0_6 = arith.constant 0 : index
    %c0_7 = arith.constant 0 : index
    %c0_8 = arith.constant 0 : index
    %5 = vector.load %arg3[%c0_6, %c0_7, %c0_8] : memref<2x420x256xbf16, #tpu.memory_space<vmem>>, vector<1x420x256xbf16>
    %6 = vector.shape_cast %5 : vector<1x420x256xbf16> to vector<420x256xbf16>
    %cst = arith.constant dense<0.000000e+00> : vector<19x256xf32>
    %7 = tpu.matmul %4, %6, %cst {dimension_numbers = #tpu.dot_dimension_numbers<[1], [0], [0], [1], [0, 0, 1, 1], [], []>} : vector<19x420xbf16>, vector<420x256xbf16>, vector<19x256xf32> -> vector<19x256xf32>
    %c1 = arith.constant 1 : index
    %c0_9 = arith.constant 0 : index
    %c0_10 = arith.constant 0 : index
    %8 = vector.load %arg3[%c1, %c0_9, %c0_10] : memref<2x420x256xbf16, #tpu.memory_space<vmem>>, vector<1x420x256xbf16>
    %9 = vector.shape_cast %8 : vector<1x420x256xbf16> to vector<420x256xbf16>
    %cst_11 = arith.constant dense<0.000000e+00> : vector<19x256xf32>
    %10 = tpu.matmul %4, %9, %cst_11 {dimension_numbers = #tpu.dot_dimension_numbers<[1], [0], [0], [1], [0, 0, 1, 1], [], []>} : vector<19x420xbf16>, vector<420x256xbf16>, vector<19x256xf32> -> vector<19x256xf32>
    %11 = arith.maximumf %7, %10 : vector<19x256xf32>
    %c0_12 = arith.constant 0 : index
    %c1_13 = arith.constant 1 : index
    %c0_14 = arith.constant 0 : index
    %c0_15 = arith.constant 0 : index
    %c0_16 = arith.constant 0 : index
    %12 = vector.load %arg2[%c0_12, %c1_13, %c0_14, %c0_15, %c0_16] : memref<1x2x1x19x420xbf16, #tpu.memory_space<vmem>>, vector<1x1x1x19x420xbf16>
    %13 = vector.shape_cast %12 : vector<1x1x1x19x420xbf16> to vector<19x420xbf16>
    %c0_17 = arith.constant 0 : index
    %c0_18 = arith.constant 0 : index
    %c0_19 = arith.constant 0 : index
    %14 = vector.load %arg3[%c0_17, %c0_18, %c0_19] : memref<2x420x256xbf16, #tpu.memory_space<vmem>>, vector<1x420x256xbf16>
    %15 = vector.shape_cast %14 : vector<1x420x256xbf16> to vector<420x256xbf16>
    %cst_20 = arith.constant dense<0.000000e+00> : vector<19x256xf32>
    %16 = tpu.matmul %13, %15, %cst_20 {dimension_numbers = #tpu.dot_dimension_numbers<[1], [0], [0], [1], [0, 0, 1, 1], [], []>} : vector<19x420xbf16>, vector<420x256xbf16>, vector<19x256xf32> -> vector<19x256xf32>
    %17 = arith.maximumf %11, %16 : vector<19x256xf32>
    %c1_21 = arith.constant 1 : index
    %c0_22 = arith.constant 0 : index
    %c0_23 = arith.constant 0 : index
    %18 = vector.load %arg3[%c1_21, %c0_22, %c0_23] : memref<2x420x256xbf16, #tpu.memory_space<vmem>>, vector<1x420x256xbf16>
    %19 = vector.shape_cast %18 : vector<1x420x256xbf16> to vector<420x256xbf16>
    %cst_24 = arith.constant dense<0.000000e+00> : vector<19x256xf32>
    %20 = tpu.matmul %13, %19, %cst_24 {dimension_numbers = #tpu.dot_dimension_numbers<[1], [0], [0], [1], [0, 0, 1, 1], [], []>} : vector<19x420xbf16>, vector<420x256xbf16>, vector<19x256xf32> -> vector<19x256xf32>
    %21 = arith.maximumf %17, %20 : vector<19x256xf32>
    %22 = arith.addf %21, %2 : vector<19x256xf32>
    %cst_25 = arith.constant 0.000000e+00 : f32
    %23 = vector.broadcast %cst_25 : f32 to vector<19x256xf32>
    %24 = arith.maximumf %22, %23 : vector<19x256xf32>
    %25 = arith.truncf %24 : vector<19x256xf32> to vector<19x256xbf16>
    %c0_26 = arith.constant 0 : index
    %c0_27 = arith.constant 0 : index
    %c0_28 = arith.constant 0 : index
    %c0_29 = arith.constant 0 : index
    %26 = vector.load %arg5[%c0_26, %c0_27, %c0_28, %c0_29] : memref<1x1x19x256xbf16, #tpu.memory_space<vmem>>, vector<1x1x19x256xbf16>
    %27 = vector.shape_cast %26 : vector<1x1x19x256xbf16> to vector<19x256xbf16>
    %28 = vector.shape_cast %25 : vector<19x256xbf16> to vector<1x1x19x256xbf16>
    tpu.vector_store %arg5[%c0_26, %c0_27, %c0_28, %c0_29], %28 {strides = array<i32>} : memref<1x1x19x256xbf16, #tpu.memory_space<vmem>>, vector<1x1x19x256xbf16>,
    return
  }
  func.func @transform_0(%arg0: i32, %arg1: i32) -> (i32, i32, i32, i32, i32) {
    %c0_i32 = arith.constant 0 : i32
    %c0_i32_0 = arith.constant 0 : i32
    %c0_i32_1 = arith.constant 0 : i32
    %c0_i32_2 = arith.constant 0 : i32
    return %arg0, %c0_i32, %arg1, %c0_i32_0, %c0_i32_1 : i32, i32, i32, i32, i32
  }
  func.func @transform_1(%arg0: i32, %arg1: i32) -> (i32, i32, i32) {
    %c0_i32 = arith.constant 0 : i32
    %c0_i32_0 = arith.constant 0 : i32
    %c0_i32_1 = arith.constant 0 : i32
    %c0_i32_2 = arith.constant 0 : i32
    return %c0_i32, %c0_i32_0, %c0_i32_1 : i32, i32, i32
  }
  func.func @transform_2(%arg0: i32, %arg1: i32) -> (i32, i32) {
    %c0_i32 = arith.constant 0 : i32
    %c0_i32_0 = arith.constant 0 : i32
    %c0_i32_1 = arith.constant 0 : i32
    return %c0_i32, %c0_i32_0 : i32, i32
  }
  func.func @transform_3(%arg0: i32, %arg1: i32) -> (i32, i32, i32, i32) {
    %c0_i32 = arith.constant 0 : i32
    %c0_i32_0 = arith.constant 0 : i32
    %c0_i32_1 = arith.constant 0 : i32
    return %arg0, %arg1, %c0_i32, %c0_i32_0 : i32, i32, i32, i32
  }
}

</mosaic_0001>

<llo_original>
// kernel: tpu_custom_call.1
$region0: #{tpu_custom_call.1}
  #allocation0 [shape = 'u32[]', space=smem, size = 0x4, offset = 0x4, fixed_abs, tag = 'smem constant byte address 0x4 - core index']
  #allocation1 [shape = 'u32[72,128]{1,0:T(1,128)}', space=vmem, size = 0x9000, scoped, tag = 'internal scratch']
  %s0 = inlined_call_operand.vmem [shape: bf16[1,2,2,19,420], index: 0, kind: input, shape index: {}]
  %s1 = inlined_call_operand.vmem [shape: bf16[2,420,256], index: 1, kind: input, shape index: {}]
  %s2 = inlined_call_operand.vmem [shape: f32[1,256], index: 2, kind: input, shape index: {}]
  %s3 = inlined_call_operand.vmem [shape: bf16[1,2,19,256], index: 3, kind: output, shape index: {}]
  %s4 = sld [smem:[#allocation0]]
  $region68: #{tpu_custom_call.1} parent=0
    _
  %s6 = ssub.s32 1, %s4
  %s7 = scalar_select 0, %s6, %s4
  $region1: #{tpu_custom_call.1} parent=0
    #allocation2 [shape = 'u8[98304]{0}', space=vmem, size = 0x18000, scoped, tag = 'input window, operand 0']
    loop: start=0, step=1, limit=4
    $region2: #{tpu_custom_call.1} parent=1 // loop_pre_header
      _
    $region3: #{tpu_custom_call.1} parent=1 // loop_header
      %s9 = sphi 0, %s13
      %p10 = scmp.ge.s32.totalorder %s9, 4
      %s16 = sphi 0, %s28
      %s17 = sphi 0, %s24
      %s18 = sphi 0, %s16
      %s19 = sphi 0, %s17
      %s20 = sphi 0, %s18
      %s21 = sphi 0, %s19
      %s33 = sphi 0, %s35
      %s36 = sphi 0, %s33
      %s37 = sphi 0, %s36
      %s53 = sphi 0, %s37
      %s57 = sphi 0, %s57
      %s59 = sphi 0, %s57
      %s60 = sphi 0, %s59
      %s74 = sphi 0, %s60
      %s78 = sphi 0, %s78
      %s80 = sphi 0, %s78
      %s81 = sphi 0, %s80
      %s95 = sphi 0, %s81
      %s103 = sphi 0, %s105
      %s106 = sphi 0, %s103
      %s107 = sphi 0, %s106
      %s123 = sphi 0, %s107
    $region4: #{tpu_custom_call.1} parent=1 // loop_header_branch
      %12 = sbr.rel (%p10) target = $region8
    $region5: #{tpu_custom_call.1} parent=1 // loop_body
      %s14 = ssub.s32 %s9, 1
      %s15 = ssub.s32 %s9, 2
      %s22 = sadd.s32 1, %s17
      %p23 = scmp.ge.s32.totalorder %s22, 2
      %s24 = scalar_select %p23, 0, %s22
      %s25 = sadd.s32 1, %s16
      %s26 = scalar_select %p23, %s25, %s16
      %p27 = scmp.ge.s32.totalorder %s26, 1
      %s28 = scalar_select %p27, 0, %s26
      %s29 = ssub.s32 %s16, %s28
      %s30 = ssub.s32 %s17, %s24
      %s31 = sor.u32 %s29, %s30
      %p32 = scmp.eq.s32.totalorder %s31, 0
      %s34 = sadd.s32 %s33, 1
      %s35 = scalar_select %p32, %s33, %s34
      %p38 = pneg %p32
      %p39 = scmp.eq.s32.totalorder %s9, 1
      %p40 = por %p38, %p39
      %p41 = scmp.ne.s32.totalorder %s33, %s36
      %p42 = scmp.eq.s32.totalorder %s9, 0
      %p43 = por %p41, %p42
      %p44 = scmp.ne.s32.totalorder %s33, %s36
      %p45 = scmp.eq.s32.totalorder %s14, 1
      %p46 = por %p44, %p45
      %p47 = scmp.ne.s32.totalorder %s36, %s37
      %p48 = scmp.eq.s32.totalorder %s14, 0
      %p49 = por %p47, %p48
      %p50 = scmp.ne.s32.totalorder %s36, %s37
      %p51 = scmp.eq.s32.totalorder %s15, 1
      %p52 = por %p50, %p51
      %p54 = scmp.ne.s32.totalorder %s37, %s53
      %p55 = scmp.eq.s32.totalorder %s15, 0
      %p56 = por %p54, %p55
      %s58 = sadd.s32 %s57, 1
      %p61 = scmp.eq.s32.totalorder %s9, 1
      %p62 = scmp.ne.s32.totalorder %s57, %s59
      %p63 = scmp.eq.s32.totalorder %s9, 0
      %p64 = por %p62, %p63
      %p65 = scmp.ne.s32.totalorder %s57, %s59
      %p66 = scmp.eq.s32.totalorder %s14, 1
      %p67 = por %p65, %p66
      %p68 = scmp.ne.s32.totalorder %s59, %s60
      %p69 = scmp.eq.s32.totalorder %s14, 0
      %p70 = por %p68, %p69
      %p71 = scmp.ne.s32.totalorder %s59, %s60
      %p72 = scmp.eq.s32.totalorder %s15, 1
      %p73 = por %p71, %p72
      %p75 = scmp.ne.s32.totalorder %s60, %s74
      %p76 = scmp.eq.s32.totalorder %s15, 0
      %p77 = por %p75, %p76
      %s79 = sadd.s32 %s78, 1
      %p82 = scmp.eq.s32.totalorder %s9, 1
      %p83 = scmp.ne.s32.totalorder %s78, %s80
      %p84 = scmp.eq.s32.totalorder %s9, 0
      %p85 = por %p83, %p84
      %p86 = scmp.ne.s32.totalorder %s78, %s80
      %p87 = scmp.eq.s32.totalorder %s14, 1
      %p88 = por %p86, %p87
      %p89 = scmp.ne.s32.totalorder %s80, %s81
      %p90 = scmp.eq.s32.totalorder %s14, 0
      %p91 = por %p89, %p90
      %p92 = scmp.ne.s32.totalorder %s80, %s81
      %p93 = scmp.eq.s32.totalorder %s15, 1
      %p94 = por %p92, %p93
      %p96 = scmp.ne.s32.totalorder %s81, %s95
      %p97 = scmp.eq.s32.totalorder %s15, 0
      %p98 = por %p96, %p97
      %s99 = ssub.s32 %s16, %s28
      %s100 = ssub.s32 %s17, %s24
      %s101 = sor.u32 %s99, %s100
      %p102 = scmp.eq.s32.totalorder %s101, 0
      %s104 = sadd.s32 %s103, 1
      %s105 = scalar_select %p102, %s103, %s104
      %p108 = pneg %p102
      %p109 = scmp.eq.s32.totalorder %s9, 1
      %p110 = por %p108, %p109
      %p111 = scmp.ne.s32.totalorder %s103, %s106
      %p112 = scmp.eq.s32.totalorder %s9, 0
      %p113 = por %p111, %p112
      %p114 = scmp.ne.s32.totalorder %s103, %s106
      %p115 = scmp.eq.s32.totalorder %s14, 1
      %p116 = por %p114, %p115
      %p117 = scmp.ne.s32.totalorder %s106, %s107
      %p118 = scmp.eq.s32.totalorder %s14, 0
      %p119 = por %p117, %p118
      %p120 = scmp.ne.s32.totalorder %s106, %s107
      %p121 = scmp.eq.s32.totalorder %s15, 1
      %p122 = por %p120, %p121
      %p124 = scmp.ne.s32.totalorder %s107, %s123
      %p125 = scmp.eq.s32.totalorder %s15, 0
      %p126 = por %p124, %p125
      %p127 = scmp.le.s32.totalorder 1, %s9
      %p128 = scmp.lt.s32.totalorder %s9, 3
      %p129 = pnand %p127, %p128
      %p130 = pneg %p129
      // Predicated region
      $region9: #{tpu_custom_call.1} parent=5 // pred_check
        _
      $region10: #{tpu_custom_call.1} parent=5 // pred_check_branch
        %132 = sbr.rel (%p129) target = $region12
      $region11: #{tpu_custom_call.1} parent=5 // pred_region
        %s133 = ssub.s32 %s9, 1
        // Predicated region
        $region13: #{tpu_custom_call.1} parent=11 // pred_check
          %p134 = pneg %p70
        $region14: #{tpu_custom_call.1} parent=11 // pred_check_branch
          %136 = sbr.rel (%p134) target = $region16
        $region15: #{tpu_custom_call.1} parent=11 // pred_region
          _
        $region16: #{tpu_custom_call.1} parent=11 // pred_fallthru
          _
        // Predicated region
        $region17: #{tpu_custom_call.1} parent=11 // pred_check
          %p137 = pneg %p91
        $region18: #{tpu_custom_call.1} parent=11 // pred_check_branch
          %139 = sbr.rel (%p137) target = $region20
        $region19: #{tpu_custom_call.1} parent=11 // pred_region
          _
        $region20: #{tpu_custom_call.1} parent=11 // pred_fallthru
          _
      $region12: #{tpu_custom_call.1} parent=5 // pred_fallthru
        _
      %p140 = scmp.lt.s32.totalorder %s9, 2
      // Predicated region
      $region21: #{tpu_custom_call.1} parent=5 // pred_check
        %p141 = pneg %p140
      $region22: #{tpu_custom_call.1} parent=5 // pred_check_branch
        %143 = sbr.rel (%p141) target = $region24
      $region23: #{tpu_custom_call.1} parent=5 // pred_region
        // Predicated region
        $region25: #{tpu_custom_call.1} parent=23 // pred_check
          %p144 = pneg %p43
        $region26: #{tpu_custom_call.1} parent=23 // pred_check_branch
          %146 = sbr.rel (%p144) target = $region28
        $region27: #{tpu_custom_call.1} parent=23 // pred_region
          %s147 = sand.u32 %s33, 1
          %s148 = sand.u32 %s33, 1
          %s149 = smul.addr %s148, 96
          %s150 = scalar_lea.vmem [#allocation2], %s149
          %s151 = smul.addr %s17, 12
          %s152 = smul.addr %s16, 48
          %s153 = sadd.s32 %s151, %s152
          %s154 = smul.addr %s153, 4
          %s155 = scalar_lea.vmem %s0, %s154
          // Predicated region
          $region29: #{tpu_custom_call.1} parent=27 // pred_check
            _
          $region30: #{tpu_custom_call.1} parent=27 // pred_check_branch
            %157 = sbr.rel (0) target = $region32
          $region31: #{tpu_custom_call.1} parent=27 // pred_region
            // Predicated region
            $region33: #{tpu_custom_call.1} parent=31 // pred_check
              _
            $region34: #{tpu_custom_call.1} parent=31 // pred_check_branch
              %159 = sbr.rel (0) target = $region36
            $region35: #{tpu_custom_call.1} parent=31 // pred_region
              loop: start=0, step=1, limit=1
              $region37: #{tpu_custom_call.1} parent=35 // loop_pre_header
                _
              $region38: #{tpu_custom_call.1} parent=35 // loop_header
                %s161 = sphi 0, %s165
                %p162 = scmp.ge.s32.totalorder %s161, 1
                %s166 = sphi %s155, %s155
                %s167 = sphi %s150, %s150
              $region39: #{tpu_custom_call.1} parent=35 // loop_header_branch
                %164 = sbr.rel (%p162) target = $region43
              $region40: #{tpu_custom_call.1} parent=35 // loop_body
                %v168 = vld [vmem:[%s166] sm:$0xff]
                %169 = vst [vmem:[%s167] sm:$0xff] %v168
                %v170 = vld [vmem:[%s166 + $0x8] sm:$0xff]
                %171 = vst [vmem:[%s167 + $0x8] sm:$0xff] %v170
                %v172 = vld [vmem:[%s166 + $0x10] sm:$0xff]
                %173 = vst [vmem:[%s167 + $0x10] sm:$0xff] %v172
                %v174 = vld [vmem:[%s166 + $0x18] sm:$0xff]
                %175 = vst [vmem:[%s167 + $0x18] sm:$0xff] %v174
                %v176 = vld [vmem:[%s166 + $0x20] sm:$0xff]
                %177 = vst [vmem:[%s167 + $0x20] sm:$0xff] %v176
                %v178 = vld [vmem:[%s166 + $0x28] sm:$0xff]
                %179 = vst [vmem:[%s167 + $0x28] sm:$0xff] %v178
                %v180 = vld [vmem:[%s166 + $0x60] sm:$0xff]
                %181 = vst [vmem:[%s167 + $0x30] sm:$0xff] %v180
                %v182 = vld [vmem:[%s166 + $0x68] sm:$0xff]
                %183 = vst [vmem:[%s167 + $0x38] sm:$0xff] %v182
                %v184 = vld [vmem:[%s166 + $0x70] sm:$0xff]
                %185 = vst [vmem:[%s167 + $0x40] sm:$0xff] %v184
                %v186 = vld [vmem:[%s166 + $0x78] sm:$0xff]
                %187 = vst [vmem:[%s167 + $0x48] sm:$0xff] %v186
                %v188 = vld [vmem:[%s166 + $0x80] sm:$0xff]
                %189 = vst [vmem:[%s167 + $0x50] sm:$0xff] %v188
                %v190 = vld [vmem:[%s166 + $0x88] sm:$0xff]
                %191 = vst [vmem:[%s167 + $0x58] sm:$0xff] %v190
              $region41: #{tpu_custom_call.1} parent=35 // loop_footer
                %s165 = sadd.s32 1, %s161
              $region42: #{tpu_custom_call.1} parent=35 // loop_footer_branch
                %160 = sbr.rel target = $region38
              $region43: #{tpu_custom_call.1} parent=35 // loop_exit
                _
            $region36: #{tpu_custom_call.1} parent=31 // pred_fallthru
              _
            // Predicated region
            $region44: #{tpu_custom_call.1} parent=31 // pred_check
              _
            $region45: #{tpu_custom_call.1} parent=31 // pred_check_branch
              %193 = sbr.rel target = $region47
            $region46: #{tpu_custom_call.1} parent=31 // pred_region
              _
            $region47: #{tpu_custom_call.1} parent=31 // pred_fallthru
              _
          $region32: #{tpu_custom_call.1} parent=27 // pred_fallthru
            _
          %194 = vnop
        $region28: #{tpu_custom_call.1} parent=23 // pred_fallthru
          _
      $region24: #{tpu_custom_call.1} parent=5 // pred_fallthru
        _
      %p195 = scmp.le.s32.totalorder 1, %s9
      %p196 = scmp.lt.s32.totalorder %s9, 3
      %p197 = pnand %p195, %p196
      %p198 = pneg %p197
      // Predicated region
      $region48: #{tpu_custom_call.1} parent=5 // pred_check
        _
      $region49: #{tpu_custom_call.1} parent=5 // pred_check_branch
        %200 = sbr.rel (%p197) target = $region51
      $region50: #{tpu_custom_call.1} parent=5 // pred_region
        %s201 = ssub.s32 %s9, 1
        %s202 = sand.u32 %s36, 1
        %s203 = sand.u32 %s36, 1
        %s204 = smul.addr %s203, 96
        %s205 = scalar_lea.vmem [#allocation2], %s204
        // Predicated region
        $region52: #{tpu_custom_call.1} parent=50 // pred_check
          %p206 = pneg %p49
        $region53: #{tpu_custom_call.1} parent=50 // pred_check_branch
          %208 = sbr.rel (%p206) target = $region55
        $region54: #{tpu_custom_call.1} parent=50 // pred_region
          _
        $region55: #{tpu_custom_call.1} parent=50 // pred_fallthru
          _
        %s209 = sand.u32 %s36, 1
        %s210 = sand.u32 %s36, 1
        %s211 = smul.addr %s210, 96
        %s212 = scalar_lea.vmem [#allocation2], %s211
        %p213 = pneg %p49
        %p214 = pneg %p46
        %p215 = pneg %p70
        %p216 = pneg %p67
        %p217 = pneg %p91
        %p218 = pneg %p88
        %p219 = pneg %p119
        %p220 = pneg %p116
        %p221 = scmp.lt.s32.totalorder %s18, 0
        %s222 = scalar_select %p221, %s18, 0
        %p223 = scmp.lt.s32.totalorder %s19, 1
        %s224 = scalar_select %p223, %s19, 1
        %s225 = smul.addr %s224, 6
        %s226 = smul.addr %s222, 12
        %s227 = sadd.s32 %s225, %s226
        %s228 = smul.addr %s227, 4
        %s229 = scalar_lea.vmem %s3, %s228
        %p230 = scmp.lt.s32.totalorder %s18, 0
        %s231 = scalar_select %p230, %s18, 0
        %p232 = scmp.lt.s32.totalorder %s19, 1
        %s233 = scalar_select %p232, %s19, 1
        %s234 = smul.addr %s233, 6
        %s235 = smul.addr %s231, 12
        %s236 = sadd.s32 %s234, %s235
        %s237 = smul.addr %s236, 4
        %s238 = scalar_lea.vmem %s3, %s237
        %v240 = vld [vmem:[%s2] sm:$0x3]
        %v242 = vperm.slane %v240, 0
        %v243 = vperm.slane %v240, 1
        %v246 = vld [vmem:[%s205] sm:$0xff]
        %v247 = vld [vmem:[%s205 + $0x8] sm:$0xff]
        %v248 = vld [vmem:[%s205 + $0x10] sm:$0xff]
        %v249 = vld [vmem:[%s205 + $0x18] sm:$0xff]
        %v250 = vld [vmem:[%s205 + $0x20] sm:$0x33]
        %v251 = vld [vmem:[%s205 + $0x28] sm:$0x33]
        %v252 = vld [vmem:[%s1] sm:$0xff]
        %v253 = vld [vmem:[%s1 + $0x8] sm:$0xff]
        %v254 = vld [vmem:[%s1 + $0x10] sm:$0xff]
        %v255 = vld [vmem:[%s1 + $0x18] sm:$0xff]
        %v256 = vld [vmem:[%s1 + $0x20] sm:$0xff]
        %v257 = vld [vmem:[%s1 + $0x28] sm:$0xff]
        %v258 = vld [vmem:[%s1 + $0x30] sm:$0xff]
        %v259 = vld [vmem:[%s1 + $0x38] sm:$0xff]
        %v260 = vld [vmem:[%s1 + $0x40] sm:$0xff]
        %v261 = vld [vmem:[%s1 + $0x48] sm:$0xff]
        %v262 = vld [vmem:[%s1 + $0x50] sm:$0xff]
        %v263 = vld [vmem:[%s1 + $0x58] sm:$0xff]
        %v264 = vld [vmem:[%s1 + $0x60] sm:$0xff]
        %v265 = vld [vmem:[%s1 + $0x68] sm:$0xff]
        %v266 = vld [vmem:[%s1 + $0x70] sm:$0xff]
        %v267 = vld [vmem:[%s1 + $0x78] sm:$0xff]
        %v268 = vld [vmem:[%s1 + $0x80] sm:$0xff]
        %v269 = vld [vmem:[%s1 + $0x88] sm:$0xff]
        %v270 = vld [vmem:[%s1 + $0x90] sm:$0xff]
        %v271 = vld [vmem:[%s1 + $0x98] sm:$0xff]
        %v272 = vld [vmem:[%s1 + $0xa0] sm:$0xff]
        %v273 = vld [vmem:[%s1 + $0xa8] sm:$0xff]
        %v274 = vld [vmem:[%s1 + $0xb0] sm:$0xff]
        %v275 = vld [vmem:[%s1 + $0xb8] sm:$0xff]
        %v276 = vld [vmem:[%s1 + $0xc0] sm:$0xff]
        %v277 = vld [vmem:[%s1 + $0xc8] sm:$0xff]
        %v278 = vld [vmem:[%s1 + $0xd0] sm:$0xff]
        %v279 = vld [vmem:[%s1 + $0xd8] sm:$0xff]
        %v280 = vld [vmem:[%s1 + $0xe0] sm:$0xff]
        %v281 = vld [vmem:[%s1 + $0xe8] sm:$0xff]
        %v282 = vld [vmem:[%s1 + $0xf0] sm:$0xff]
        %v283 = vld [vmem:[%s1 + $0xf8] sm:$0xff]
        %v284 = vld [vmem:[%s1 + $0x100] sm:$0xff]
        %v285 = vld [vmem:[%s1 + $0x108] sm:$0xff]
        %v286 = vld [vmem:[%s1 + $0x110] sm:$0xff]
        %v287 = vld [vmem:[%s1 + $0x118] sm:$0xff]
        %v288 = vld [vmem:[%s1 + $0x120] sm:$0xff]
        %v289 = vld [vmem:[%s1 + $0x128] sm:$0xff]
        %v290 = vld [vmem:[%s1 + $0x130] sm:$0xff]
        %v291 = vld [vmem:[%s1 + $0x138] sm:$0xff]
        %v292 = vld [vmem:[%s1 + $0x140] sm:$0xff]
        %v293 = vld [vmem:[%s1 + $0x148] sm:$0xff]
        %v294 = vld [vmem:[%s1 + $0x150] sm:$0xff]
        %v295 = vld [vmem:[%s1 + $0x158] sm:$0xff]
        %v296 = vld [vmem:[%s1 + $0x160] sm:$0xff]
        %v297 = vld [vmem:[%s1 + $0x168] sm:$0xff]
        %v298 = vld [vmem:[%s1 + $0x170] sm:$0xff]
        %v299 = vld [vmem:[%s1 + $0x178] sm:$0xff]
        %v300 = vld [vmem:[%s1 + $0x180] sm:$0xff]
        %v301 = vld [vmem:[%s1 + $0x188] sm:$0xff]
        %v302 = vld [vmem:[%s1 + $0x190] sm:$0xff]
        %v303 = vld [vmem:[%s1 + $0x198] sm:$0xff]
        %v304 = vld [vmem:[%s1 + $0x1a0] sm:$0x33]
        %v311 = vunpack.c.l.b16 %v246
        %v312 = vunpack.c.h.b16 %v246
        %v313 = vunpack.c.l.b16 %v247
        %v314 = vunpack.c.h.b16 %v247
        %v315 = vunpack.c.l.b16 %v248
        %v316 = vunpack.c.h.b16 %v248
        %v317 = vunpack.c.l.b16 %v249
        %v318 = vunpack.c.h.b16 %v249
        %v319 = vunpack.c.l.b16 %v250
        %v320 = vunpack.c.h.b16 %v250
        %v321 = vunpack.c.l.b16 %v251
        %v322 = vunpack.c.h.b16 %v251
        %v323 = vpack.c.b16 %v315, %v311
        %v324 = vpack.c.b16 %v316, %v312
        %v325 = vpack.c.b16 %v317, %v313
        %v326 = vpack.c.b16 %v318, %v314
        %v327 = vpack.c.b16 %v319, %v319
        %v328 = vpack.c.b16 %v320, %v320
        %v329 = vpack.c.b16 %v321, %v321
        %v330 = vpack.c.b16 %v322, %v322
        %v390 = vunpack.c.l.b16 %v252
        %v391 = vunpack.c.h.b16 %v252
        %v392 = vunpack.c.l.b16 %v253
        %v393 = vunpack.c.h.b16 %v253
        %v394 = vunpack.c.l.b16 %v254
        %v395 = vunpack.c.h.b16 %v254
        %v396 = vunpack.c.l.b16 %v255
        %v397 = vunpack.c.h.b16 %v255
        %v398 = vunpack.c.l.b16 %v256
        %v399 = vunpack.c.h.b16 %v256
        %v400 = vunpack.c.l.b16 %v257
        %v401 = vunpack.c.h.b16 %v257
        %v402 = vunpack.c.l.b16 %v258
        %v403 = vunpack.c.h.b16 %v258
        %v404 = vunpack.c.l.b16 %v259
        %v405 = vunpack.c.h.b16 %v259
        %v406 = vunpack.c.l.b16 %v260
        %v407 = vunpack.c.h.b16 %v260
        %v408 = vunpack.c.l.b16 %v261
        %v409 = vunpack.c.h.b16 %v261
        %v410 = vunpack.c.l.b16 %v262
        %v411 = vunpack.c.h.b16 %v262
        %v412 = vunpack.c.l.b16 %v263
        %v413 = vunpack.c.h.b16 %v263
        %v414 = vunpack.c.l.b16 %v264
        %v415 = vunpack.c.h.b16 %v264
        %v416 = vunpack.c.l.b16 %v265
        %v417 = vunpack.c.h.b16 %v265
        %v418 = vunpack.c.l.b16 %v266
        %v419 = vunpack.c.h.b16 %v266
        %v420 = vunpack.c.l.b16 %v267
        %v421 = vunpack.c.h.b16 %v267
        %v422 = vunpack.c.l.b16 %v268
        %v423 = vunpack.c.h.b16 %v268
        %v424 = vunpack.c.l.b16 %v269
        %v425 = vunpack.c.h.b16 %v269
        %v426 = vunpack.c.l.b16 %v270
        %v427 = vunpack.c.h.b16 %v270
        %v428 = vunpack.c.l.b16 %v271
        %v429 = vunpack.c.h.b16 %v271
        %v430 = vunpack.c.l.b16 %v272
        %v431 = vunpack.c.h.b16 %v272
        %v432 = vunpack.c.l.b16 %v273
        %v433 = vunpack.c.h.b16 %v273
        %v434 = vunpack.c.l.b16 %v274
        %v435 = vunpack.c.h.b16 %v274
        %v436 = vunpack.c.l.b16 %v275
        %v437 = vunpack.c.h.b16 %v275
        %v438 = vunpack.c.l.b16 %v276
        %v439 = vunpack.c.h.b16 %v276
        %v440 = vunpack.c.l.b16 %v277
        %v441 = vunpack.c.h.b16 %v277
        %v442 = vunpack.c.l.b16 %v278
        %v443 = vunpack.c.h.b16 %v278
        %v444 = vunpack.c.l.b16 %v279
        %v445 = vunpack.c.h.b16 %v279
        %v446 = vunpack.c.l.b16 %v280
        %v447 = vunpack.c.h.b16 %v280
        %v448 = vunpack.c.l.b16 %v281
        %v449 = vunpack.c.h.b16 %v281
        %v450 = vunpack.c.l.b16 %v282
        %v451 = vunpack.c.h.b16 %v282
        %v452 = vunpack.c.l.b16 %v283
        %v453 = vunpack.c.h.b16 %v283
        %v454 = vunpack.c.l.b16 %v284
        %v455 = vunpack.c.h.b16 %v284
        %v456 = vunpack.c.l.b16 %v285
        %v457 = vunpack.c.h.b16 %v285
        %v458 = vunpack.c.l.b16 %v286
        %v459 = vunpack.c.h.b16 %v286
        %v460 = vunpack.c.l.b16 %v287
        %v461 = vunpack.c.h.b16 %v287
        %v462 = vunpack.c.l.b16 %v288
        %v463 = vunpack.c.h.b16 %v288
        %v464 = vunpack.c.l.b16 %v289
        %v465 = vunpack.c.h.b16 %v289
        %v466 = vunpack.c.l.b16 %v290
        %v467 = vunpack.c.h.b16 %v290
        %v468 = vunpack.c.l.b16 %v291
        %v469 = vunpack.c.h.b16 %v291
        %v470 = vunpack.c.l.b16 %v292
        %v471 = vunpack.c.h.b16 %v292
        %v472 = vunpack.c.l.b16 %v293
        %v473 = vunpack.c.h.b16 %v293
        %v474 = vunpack.c.l.b16 %v294
        %v475 = vunpack.c.h.b16 %v294
        %v476 = vunpack.c.l.b16 %v295
        %v477 = vunpack.c.h.b16 %v295
        %v478 = vunpack.c.l.b16 %v296
        %v479 = vunpack.c.h.b16 %v296
        %v480 = vunpack.c.l.b16 %v297
        %v481 = vunpack.c.h.b16 %v297
        %v482 = vunpack.c.l.b16 %v298
        %v483 = vunpack.c.h.b16 %v298
        %v484 = vunpack.c.l.b16 %v299
        %v485 = vunpack.c.h.b16 %v299
        %v486 = vunpack.c.l.b16 %v300
        %v487 = vunpack.c.h.b16 %v300
        %v488 = vunpack.c.l.b16 %v301
        %v489 = vunpack.c.h.b16 %v301
        %v490 = vunpack.c.l.b16 %v302
        %v491 = vunpack.c.h.b16 %v302
        %v492 = vunpack.c.l.b16 %v303
        %v493 = vunpack.c.h.b16 %v303
        %v494 = vunpack.c.l.b16 %v304
        %v495 = vunpack.c.h.b16 %v304
        %v496 = vpack.c.b16 %v392, %v390
        %v497 = vpack.c.b16 %v393, %v391
        %v498 = vpack.c.b16 %v396, %v394
        %v499 = vpack.c.b16 %v397, %v395
        %v500 = vpack.c.b16 %v400, %v398
        %v501 = vpack.c.b16 %v401, %v399
        %v502 = vpack.c.b16 %v404, %v402
        %v503 = vpack.c.b16 %v405, %v403
        %v504 = vpack.c.b16 %v408, %v406
        %v505 = vpack.c.b16 %v409, %v407
        %v506 = vpack.c.b16 %v412, %v410
        %v507 = vpack.c.b16 %v413, %v411
        %v508 = vpack.c.b16 %v416, %v414
        %v509 = vpack.c.b16 %v417, %v415
        %v510 = vpack.c.b16 %v420, %v418
        %v511 = vpack.c.b16 %v421, %v419
        %v512 = vpack.c.b16 %v424, %v422
        %v513 = vpack.c.b16 %v425, %v423
        %v514 = vpack.c.b16 %v428, %v426
        %v515 = vpack.c.b16 %v429, %v427
        %v516 = vpack.c.b16 %v432, %v430
        %v517 = vpack.c.b16 %v433, %v431
        %v518 = vpack.c.b16 %v436, %v434
        %v519 = vpack.c.b16 %v437, %v435
        %v520 = vpack.c.b16 %v440, %v438
        %v521 = vpack.c.b16 %v441, %v439
        %v522 = vpack.c.b16 %v444, %v442
        %v523 = vpack.c.b16 %v445, %v443
        %v524 = vpack.c.b16 %v448, %v446
        %v525 = vpack.c.b16 %v449, %v447
        %v526 = vpack.c.b16 %v452, %v450
        %v527 = vpack.c.b16 %v453, %v451
        %v528 = vpack.c.b16 %v456, %v454
        %v529 = vpack.c.b16 %v457, %v455
        %v530 = vpack.c.b16 %v460, %v458
        %v531 = vpack.c.b16 %v461, %v459
        %v532 = vpack.c.b16 %v464, %v462
        %v533 = vpack.c.b16 %v465, %v463
        %v534 = vpack.c.b16 %v468, %v466
        %v535 = vpack.c.b16 %v469, %v467
        %v536 = vpack.c.b16 %v472, %v470
        %v537 = vpack.c.b16 %v473, %v471
        %v538 = vpack.c.b16 %v476, %v474
        %v539 = vpack.c.b16 %v477, %v475
        %v540 = vpack.c.b16 %v480, %v478
        %v541 = vpack.c.b16 %v481, %v479
        %v542 = vpack.c.b16 %v484, %v482
        %v543 = vpack.c.b16 %v485, %v483
        %v544 = vpack.c.b16 %v488, %v486
        %v545 = vpack.c.b16 %v489, %v487
        %v546 = vpack.c.b16 %v492, %v490
        %v547 = vpack.c.b16 %v493, %v491
        %v548 = vpack.c.b16 %v494, %v494
        %v549 = vpack.c.b16 %v495, %v495
        %vm602 = vcmask 293888
        %v604 = vsel %vm602, %v326, 0
        %v607 = vsel %vm602, %v330, 0
        %vm609 = vcmask 1041408
        %v611 = vsel %vm609, %v548, 0
        %v614 = vsel %vm609, %v549, 0
        %616 = vmatpush.bf16.msra.mxu0 %v510
        %617 = vmatpush.bf16.msra.mxu0 %v508
        %618 = vmatpush.bf16.msra.mxu0 %v506
        %619 = vmatpush.bf16.msra.mxu0 %v504
        %620 = vmatpush.bf16.msra.mxu0 %v502
        %621 = vmatpush.bf16.msra.mxu0 %v500
        %622 = vmatpush.bf16.msra.mxu0 %v498
        %623 = vmatpush.bf16.msra.mxu0 %v496
        %624 = vmatmul.bf16.gmra.mxu0 %v323
        %v625 = vpop.f32.mrf.mxu0
        %v626 = vadd.f32 0.0, %v625
        %v627 = vpop.f32.mrf.mxu0
        %v628 = vadd.f32 0.0, %v627
        %629 = vmatmul.bf16.gmra.mxu0 %v327
        %v630 = vpop.f32.mrf.mxu0
        %v631 = vadd.f32 0.0, %v630
        %v632 = vpop.f32.mrf.mxu0
        %633 = vdwg.mxu0
        %634 = vmatpush.bf16.msra.mxu0 %v526
        %635 = vmatpush.bf16.msra.mxu0 %v524
        %636 = vmatpush.bf16.msra.mxu0 %v522
        %637 = vmatpush.bf16.msra.mxu0 %v520
        %638 = vmatpush.bf16.msra.mxu0 %v518
        %639 = vmatpush.bf16.msra.mxu0 %v516
        %640 = vmatpush.bf16.msra.mxu0 %v514
        %641 = vmatpush.bf16.msra.mxu0 %v512
        %642 = vmatmul.bf16.gmra.mxu0 %v324
        %v643 = vpop.f32.mrf.mxu0
        %v644 = vadd.f32 %v626, %v643
        %v645 = vpop.f32.mrf.mxu0
        %v646 = vadd.f32 %v628, %v645
        %647 = vmatmul.bf16.gmra.mxu0 %v328
        %v648 = vpop.f32.mrf.mxu0
        %v649 = vadd.f32 %v631, %v648
        %v650 = vpop.f32.mrf.mxu0
        %651 = vdwg.mxu0
        %652 = vmatpush.bf16.msra.mxu0 %v542
        %653 = vmatpush.bf16.msra.mxu0 %v540
        %654 = vmatpush.bf16.msra.mxu0 %v538
        %655 = vmatpush.bf16.msra.mxu0 %v536
        %656 = vmatpush.bf16.msra.mxu0 %v534
        %657 = vmatpush.bf16.msra.mxu0 %v532
        %658 = vmatpush.bf16.msra.mxu0 %v530
        %659 = vmatpush.bf16.msra.mxu0 %v528
        %660 = vmatmul.bf16.gmra.mxu0 %v325
        %v661 = vpop.f32.mrf.mxu0
        %v662 = vadd.f32 %v644, %v661
        %v663 = vpop.f32.mrf.mxu0
        %v664 = vadd.f32 %v646, %v663
        %665 = vmatmul.bf16.gmra.mxu0 %v329
        %v666 = vpop.f32.mrf.mxu0
        %v667 = vadd.f32 %v649, %v666
        %v668 = vpop.f32.mrf.mxu0
        %669 = vdwg.mxu0
        %670 = vmatpush.bf16.msra.mxu0 0
        %671 = vmatpush.bf16.msra.mxu0 0
        %672 = vmatpush.bf16.msra.mxu0 0
        %673 = vmatpush.bf16.msra.mxu0 0
        %674 = vmatpush.bf16.msra.mxu0 0
        %675 = vmatpush.bf16.msra.mxu0 %v611
        %676 = vmatpush.bf16.msra.mxu0 %v546
        %677 = vmatpush.bf16.msra.mxu0 %v544
        %678 = vmatmul.bf16.gmra.mxu0 %v604
        %v679 = vpop.f32.mrf.mxu0
        %v680 = vadd.f32 %v662, %v679
        %v681 = vpop.f32.mrf.mxu0
        %v682 = vadd.f32 %v664, %v681
        %683 = vmatmul.bf16.gmra.mxu0 %v607
        %v684 = vpop.f32.mrf.mxu0
        %v685 = vadd.f32 %v667, %v684
        %v686 = vpop.f32.mrf.mxu0
        %687 = vdwg.mxu0
        %688 = vmatpush.bf16.msra.mxu0 %v511
        %689 = vmatpush.bf16.msra.mxu0 %v509
        %690 = vmatpush.bf16.msra.mxu0 %v507
        %691 = vmatpush.bf16.msra.mxu0 %v505
        %692 = vmatpush.bf16.msra.mxu0 %v503
        %693 = vmatpush.bf16.msra.mxu0 %v501
        %694 = vmatpush.bf16.msra.mxu0 %v499
        %695 = vmatpush.bf16.msra.mxu0 %v497
        %696 = vmatmul.bf16.gmra.mxu0 %v323
        %v697 = vpop.f32.mrf.mxu0
        %v698 = vadd.f32 0.0, %v697
        %v699 = vpop.f32.mrf.mxu0
        %v700 = vadd.f32 0.0, %v699
        %701 = vmatmul.bf16.gmra.mxu0 %v327
        %v702 = vpop.f32.mrf.mxu0
        %v703 = vadd.f32 0.0, %v702
        %v704 = vpop.f32.mrf.mxu0
        %705 = vdwg.mxu0
        %706 = vmatpush.bf16.msra.mxu0 %v527
        %707 = vmatpush.bf16.msra.mxu0 %v525
        %708 = vmatpush.bf16.msra.mxu0 %v523
        %709 = vmatpush.bf16.msra.mxu0 %v521
        %710 = vmatpush.bf16.msra.mxu0 %v519
        %711 = vmatpush.bf16.msra.mxu0 %v517
        %712 = vmatpush.bf16.msra.mxu0 %v515
        %713 = vmatpush.bf16.msra.mxu0 %v513
        %714 = vmatmul.bf16.gmra.mxu0 %v324
        %v715 = vpop.f32.mrf.mxu0
        %v716 = vadd.f32 %v698, %v715
        %v717 = vpop.f32.mrf.mxu0
        %v718 = vadd.f32 %v700, %v717
        %719 = vmatmul.bf16.gmra.mxu0 %v328
        %v720 = vpop.f32.mrf.mxu0
        %v721 = vadd.f32 %v703, %v720
        %v722 = vpop.f32.mrf.mxu0
        %723 = vdwg.mxu0
        %724 = vmatpush.bf16.msra.mxu0 %v543
        %725 = vmatpush.bf16.msra.mxu0 %v541
        %726 = vmatpush.bf16.msra.mxu0 %v539
        %727 = vmatpush.bf16.msra.mxu0 %v537
        %728 = vmatpush.bf16.msra.mxu0 %v535
        %729 = vmatpush.bf16.msra.mxu0 %v533
        %730 = vmatpush.bf16.msra.mxu0 %v531
        %731 = vmatpush.bf16.msra.mxu0 %v529
        %732 = vmatmul.bf16.gmra.mxu0 %v325
        %v733 = vpop.f32.mrf.mxu0
        %v734 = vadd.f32 %v716, %v733
        %v735 = vpop.f32.mrf.mxu0
        %v736 = vadd.f32 %v718, %v735
        %737 = vmatmul.bf16.gmra.mxu0 %v329
        %v738 = vpop.f32.mrf.mxu0
        %v739 = vadd.f32 %v721, %v738
        %v740 = vpop.f32.mrf.mxu0
        %741 = vdwg.mxu0
        %742 = vmatpush.bf16.msra.mxu0 0
        %743 = vmatpush.bf16.msra.mxu0 0
        %744 = vmatpush.bf16.msra.mxu0 0
        %745 = vmatpush.bf16.msra.mxu0 0
        %746 = vmatpush.bf16.msra.mxu0 0
        %747 = vmatpush.bf16.msra.mxu0 %v614
        %748 = vmatpush.bf16.msra.mxu0 %v547
        %749 = vmatpush.bf16.msra.mxu0 %v545
        %750 = vmatmul.bf16.gmra.mxu0 %v604
        %v751 = vpop.f32.mrf.mxu0
        %v752 = vadd.f32 %v734, %v751
        %v753 = vpop.f32.mrf.mxu0
        %v754 = vadd.f32 %v736, %v753
        %755 = vmatmul.bf16.gmra.mxu0 %v607
        %v756 = vpop.f32.mrf.mxu0
        %v757 = vadd.f32 %v739, %v756
        %v758 = vpop.f32.mrf.mxu0
        %759 = vdwg.mxu0
        %s760 = scalar_lea.vmem %s1, 424
        %v761 = vld [vmem:[%s760] sm:$0xff]
        %v762 = vld [vmem:[%s760 + $0x8] sm:$0xff]
        %v763 = vld [vmem:[%s760 + $0x10] sm:$0xff]
        %v764 = vld [vmem:[%s760 + $0x18] sm:$0xff]
        %v765 = vld [vmem:[%s760 + $0x20] sm:$0xff]
        %v766 = vld [vmem:[%s760 + $0x28] sm:$0xff]
        %v767 = vld [vmem:[%s760 + $0x30] sm:$0xff]
        %v768 = vld [vmem:[%s760 + $0x38] sm:$0xff]
        %v769 = vld [vmem:[%s760 + $0x40] sm:$0xff]
        %v770 = vld [vmem:[%s760 + $0x48] sm:$0xff]
        %v771 = vld [vmem:[%s760 + $0x50] sm:$0xff]
        %v772 = vld [vmem:[%s760 + $0x58] sm:$0xff]
        %v773 = vld [vmem:[%s760 + $0x60] sm:$0xff]
        %v774 = vld [vmem:[%s760 + $0x68] sm:$0xff]
        %v775 = vld [vmem:[%s760 + $0x70] sm:$0xff]
        %v776 = vld [vmem:[%s760 + $0x78] sm:$0xff]
        %v777 = vld [vmem:[%s760 + $0x80] sm:$0xff]
        %v778 = vld [vmem:[%s760 + $0x88] sm:$0xff]
        %v779 = vld [vmem:[%s760 + $0x90] sm:$0xff]
        %v780 = vld [vmem:[%s760 + $0x98] sm:$0xff]
        %v781 = vld [vmem:[%s760 + $0xa0] sm:$0xff]
        %v782 = vld [vmem:[%s760 + $0xa8] sm:$0xff]
        %v783 = vld [vmem:[%s760 + $0xb0] sm:$0xff]
        %v784 = vld [vmem:[%s760 + $0xb8] sm:$0xff]
        %v785 = vld [vmem:[%s760 + $0xc0] sm:$0xff]
        %v786 = vld [vmem:[%s760 + $0xc8] sm:$0xff]
        %v787 = vld [vmem:[%s760 + $0xd0] sm:$0xff]
        %v788 = vld [vmem:[%s760 + $0xd8] sm:$0xff]
        %v789 = vld [vmem:[%s760 + $0xe0] sm:$0xff]
        %v790 = vld [vmem:[%s760 + $0xe8] sm:$0xff]
        %v791 = vld [vmem:[%s760 + $0xf0] sm:$0xff]
        %v792 = vld [vmem:[%s760 + $0xf8] sm:$0xff]
        %v793 = vld [vmem:[%s760 + $0x100] sm:$0xff]
        %v794 = vld [vmem:[%s760 + $0x108] sm:$0xff]
        %v795 = vld [vmem:[%s760 + $0x110] sm:$0xff]
        %v796 = vld [vmem:[%s760 + $0x118] sm:$0xff]
        %v797 = vld [vmem:[%s760 + $0x120] sm:$0xff]
        %v798 = vld [vmem:[%s760 + $0x128] sm:$0xff]
        %v799 = vld [vmem:[%s760 + $0x130] sm:$0xff]
        %v800 = vld [vmem:[%s760 + $0x138] sm:$0xff]
        %v801 = vld [vmem:[%s760 + $0x140] sm:$0xff]
        %v802 = vld [vmem:[%s760 + $0x148] sm:$0xff]
        %v803 = vld [vmem:[%s760 + $0x150] sm:$0xff]
        %v804 = vld [vmem:[%s760 + $0x158] sm:$0xff]
        %v805 = vld [vmem:[%s760 + $0x160] sm:$0xff]
        %v806 = vld [vmem:[%s760 + $0x168] sm:$0xff]
        %v807 = vld [vmem:[%s760 + $0x170] sm:$0xff]
        %v808 = vld [vmem:[%s760 + $0x178] sm:$0xff]
        %v809 = vld [vmem:[%s760 + $0x180] sm:$0xff]
        %v810 = vld [vmem:[%s760 + $0x188] sm:$0xff]
        %v811 = vld [vmem:[%s760 + $0x190] sm:$0xff]
        %v812 = vld [vmem:[%s760 + $0x198] sm:$0xff]
        %v813 = vld [vmem:[%s760 + $0x1a0] sm:$0x33]
        %v867 = vunpack.c.l.b16 %v761
        %v868 = vunpack.c.h.b16 %v761
        %v869 = vunpack.c.l.b16 %v762
        %v870 = vunpack.c.h.b16 %v762
        %v871 = vunpack.c.l.b16 %v763
        %v872 = vunpack.c.h.b16 %v763
        %v873 = vunpack.c.l.b16 %v764
        %v874 = vunpack.c.h.b16 %v764
        %v875 = vunpack.c.l.b16 %v765
        %v876 = vunpack.c.h.b16 %v765
        %v877 = vunpack.c.l.b16 %v766
        %v878 = vunpack.c.h.b16 %v766
        %v879 = vunpack.c.l.b16 %v767
        %v880 = vunpack.c.h.b16 %v767
        %v881 = vunpack.c.l.b16 %v768
        %v882 = vunpack.c.h.b16 %v768
        %v883 = vunpack.c.l.b16 %v769
        %v884 = vunpack.c.h.b16 %v769
        %v885 = vunpack.c.l.b16 %v770
        %v886 = vunpack.c.h.b16 %v770
        %v887 = vunpack.c.l.b16 %v771
        %v888 = vunpack.c.h.b16 %v771
        %v889 = vunpack.c.l.b16 %v772
        %v890 = vunpack.c.h.b16 %v772
        %v891 = vunpack.c.l.b16 %v773
        %v892 = vunpack.c.h.b16 %v773
        %v893 = vunpack.c.l.b16 %v774
        %v894 = vunpack.c.h.b16 %v774
        %v895 = vunpack.c.l.b16 %v775
        %v896 = vunpack.c.h.b16 %v775
        %v897 = vunpack.c.l.b16 %v776
        %v898 = vunpack.c.h.b16 %v776
        %v899 = vunpack.c.l.b16 %v777
        %v900 = vunpack.c.h.b16 %v777
        %v901 = vunpack.c.l.b16 %v778
        %v902 = vunpack.c.h.b16 %v778
        %v903 = vunpack.c.l.b16 %v779
        %v904 = vunpack.c.h.b16 %v779
        %v905 = vunpack.c.l.b16 %v780
        %v906 = vunpack.c.h.b16 %v780
        %v907 = vunpack.c.l.b16 %v781
        %v908 = vunpack.c.h.b16 %v781
        %v909 = vunpack.c.l.b16 %v782
        %v910 = vunpack.c.h.b16 %v782
        %v911 = vunpack.c.l.b16 %v783
        %v912 = vunpack.c.h.b16 %v783
        %v913 = vunpack.c.l.b16 %v784
        %v914 = vunpack.c.h.b16 %v784
        %v915 = vunpack.c.l.b16 %v785
        %v916 = vunpack.c.h.b16 %v785
        %v917 = vunpack.c.l.b16 %v786
        %v918 = vunpack.c.h.b16 %v786
        %v919 = vunpack.c.l.b16 %v787
        %v920 = vunpack.c.h.b16 %v787
        %v921 = vunpack.c.l.b16 %v788
        %v922 = vunpack.c.h.b16 %v788
        %v923 = vunpack.c.l.b16 %v789
        %v924 = vunpack.c.h.b16 %v789
        %v925 = vunpack.c.l.b16 %v790
        %v926 = vunpack.c.h.b16 %v790
        %v927 = vunpack.c.l.b16 %v791
        %v928 = vunpack.c.h.b16 %v791
        %v929 = vunpack.c.l.b16 %v792
        %v930 = vunpack.c.h.b16 %v792
        %v931 = vunpack.c.l.b16 %v793
        %v932 = vunpack.c.h.b16 %v793
        %v933 = vunpack.c.l.b16 %v794
        %v934 = vunpack.c.h.b16 %v794
        %v935 = vunpack.c.l.b16 %v795
        %v936 = vunpack.c.h.b16 %v795
        %v937 = vunpack.c.l.b16 %v796
        %v938 = vunpack.c.h.b16 %v796
        %v939 = vunpack.c.l.b16 %v797
        %v940 = vunpack.c.h.b16 %v797
        %v941 = vunpack.c.l.b16 %v798
        %v942 = vunpack.c.h.b16 %v798
        %v943 = vunpack.c.l.b16 %v799
        %v944 = vunpack.c.h.b16 %v799
        %v945 = vunpack.c.l.b16 %v800
        %v946 = vunpack.c.h.b16 %v800
        %v947 = vunpack.c.l.b16 %v801
        %v948 = vunpack.c.h.b16 %v801
        %v949 = vunpack.c.l.b16 %v802
        %v950 = vunpack.c.h.b16 %v802
        %v951 = vunpack.c.l.b16 %v803
        %v952 = vunpack.c.h.b16 %v803
        %v953 = vunpack.c.l.b16 %v804
        %v954 = vunpack.c.h.b16 %v804
        %v955 = vunpack.c.l.b16 %v805
        %v956 = vunpack.c.h.b16 %v805
        %v957 = vunpack.c.l.b16 %v806
        %v958 = vunpack.c.h.b16 %v806
        %v959 = vunpack.c.l.b16 %v807
        %v960 = vunpack.c.h.b16 %v807
        %v961 = vunpack.c.l.b16 %v808
        %v962 = vunpack.c.h.b16 %v808
        %v963 = vunpack.c.l.b16 %v809
        %v964 = vunpack.c.h.b16 %v809
        %v965 = vunpack.c.l.b16 %v810
        %v966 = vunpack.c.h.b16 %v810
        %v967 = vunpack.c.l.b16 %v811
        %v968 = vunpack.c.h.b16 %v811
        %v969 = vunpack.c.l.b16 %v812
        %v970 = vunpack.c.h.b16 %v812
        %v971 = vunpack.c.l.b16 %v813
        %v972 = vunpack.c.h.b16 %v813
        %v973 = vpack.c.b16 %v869, %v867
        %v974 = vpack.c.b16 %v870, %v868
        %v975 = vpack.c.b16 %v873, %v871
        %v976 = vpack.c.b16 %v874, %v872
        %v977 = vpack.c.b16 %v877, %v875
        %v978 = vpack.c.b16 %v878, %v876
        %v979 = vpack.c.b16 %v881, %v879
        %v980 = vpack.c.b16 %v882, %v880
        %v981 = vpack.c.b16 %v885, %v883
        %v982 = vpack.c.b16 %v886, %v884
        %v983 = vpack.c.b16 %v889, %v887
        %v984 = vpack.c.b16 %v890, %v888
        %v985 = vpack.c.b16 %v893, %v891
        %v986 = vpack.c.b16 %v894, %v892
        %v987 = vpack.c.b16 %v897, %v895
        %v988 = vpack.c.b16 %v898, %v896
        %v989 = vpack.c.b16 %v901, %v899
        %v990 = vpack.c.b16 %v902, %v900
        %v991 = vpack.c.b16 %v905, %v903
        %v992 = vpack.c.b16 %v906, %v904
        %v993 = vpack.c.b16 %v909, %v907
        %v994 = vpack.c.b16 %v910, %v908
        %v995 = vpack.c.b16 %v913, %v911
        %v996 = vpack.c.b16 %v914, %v912
        %v997 = vpack.c.b16 %v917, %v915
        %v998 = vpack.c.b16 %v918, %v916
        %v999 = vpack.c.b16 %v921, %v919
        %v1000 = vpack.c.b16 %v922, %v920
        %v1001 = vpack.c.b16 %v925, %v923
        %v1002 = vpack.c.b16 %v926, %v924
        %v1003 = vpack.c.b16 %v929, %v927
        %v1004 = vpack.c.b16 %v930, %v928
        %v1005 = vpack.c.b16 %v933, %v931
        %v1006 = vpack.c.b16 %v934, %v932
        %v1007 = vpack.c.b16 %v937, %v935
        %v1008 = vpack.c.b16 %v938, %v936
        %v1009 = vpack.c.b16 %v941, %v939
        %v1010 = vpack.c.b16 %v942, %v940
        %v1011 = vpack.c.b16 %v945, %v943
        %v1012 = vpack.c.b16 %v946, %v944
        %v1013 = vpack.c.b16 %v949, %v947
        %v1014 = vpack.c.b16 %v950, %v948
        %v1015 = vpack.c.b16 %v953, %v951
        %v1016 = vpack.c.b16 %v954, %v952
        %v1017 = vpack.c.b16 %v957, %v955
        %v1018 = vpack.c.b16 %v958, %v956
        %v1019 = vpack.c.b16 %v961, %v959
        %v1020 = vpack.c.b16 %v962, %v960
        %v1021 = vpack.c.b16 %v965, %v963
        %v1022 = vpack.c.b16 %v966, %v964
        %v1023 = vpack.c.b16 %v969, %v967
        %v1024 = vpack.c.b16 %v970, %v968
        %v1025 = vpack.c.b16 %v971, %v971
        %v1026 = vpack.c.b16 %v972, %v972
        %v1080 = vsel %vm609, %v1025, 0
        %v1083 = vsel %vm609, %v1026, 0
        %1085 = vmatpush.bf16.msra.mxu0 %v987
        %1086 = vmatpush.bf16.msra.mxu0 %v985
        %1087 = vmatpush.bf16.msra.mxu0 %v983
        %1088 = vmatpush.bf16.msra.mxu0 %v981
        %1089 = vmatpush.bf16.msra.mxu0 %v979
        %1090 = vmatpush.bf16.msra.mxu0 %v977
        %1091 = vmatpush.bf16.msra.mxu0 %v975
        %1092 = vmatpush.bf16.msra.mxu0 %v973
        %1093 = vmatmul.bf16.gmra.mxu0 %v323
        %v1094 = vpop.f32.mrf.mxu0
        %v1095 = vadd.f32 0.0, %v1094
        %v1096 = vpop.f32.mrf.mxu0
        %v1097 = vadd.f32 0.0, %v1096
        %1098 = vmatmul.bf16.gmra.mxu0 %v327
        %v1099 = vpop.f32.mrf.mxu0
        %v1100 = vadd.f32 0.0, %v1099
        %v1101 = vpop.f32.mrf.mxu0
        %1102 = vdwg.mxu0
        %1103 = vmatpush.bf16.msra.mxu0 %v1003
        %1104 = vmatpush.bf16.msra.mxu0 %v1001
        %1105 = vmatpush.bf16.msra.mxu0 %v999
        %1106 = vmatpush.bf16.msra.mxu0 %v997
        %1107 = vmatpush.bf16.msra.mxu0 %v995
        %1108 = vmatpush.bf16.msra.mxu0 %v993
        %1109 = vmatpush.bf16.msra.mxu0 %v991
        %1110 = vmatpush.bf16.msra.mxu0 %v989
        %1111 = vmatmul.bf16.gmra.mxu0 %v324
        %v1112 = vpop.f32.mrf.mxu0
        %v1113 = vadd.f32 %v1095, %v1112
        %v1114 = vpop.f32.mrf.mxu0
        %v1115 = vadd.f32 %v1097, %v1114
        %1116 = vmatmul.bf16.gmra.mxu0 %v328
        %v1117 = vpop.f32.mrf.mxu0
        %v1118 = vadd.f32 %v1100, %v1117
        %v1119 = vpop.f32.mrf.mxu0
        %1120 = vdwg.mxu0
        %1121 = vmatpush.bf16.msra.mxu0 %v1019
        %1122 = vmatpush.bf16.msra.mxu0 %v1017
        %1123 = vmatpush.bf16.msra.mxu0 %v1015
        %1124 = vmatpush.bf16.msra.mxu0 %v1013
        %1125 = vmatpush.bf16.msra.mxu0 %v1011
        %1126 = vmatpush.bf16.msra.mxu0 %v1009
        %1127 = vmatpush.bf16.msra.mxu0 %v1007
        %1128 = vmatpush.bf16.msra.mxu0 %v1005
        %1129 = vmatmul.bf16.gmra.mxu0 %v325
        %v1130 = vpop.f32.mrf.mxu0
        %v1131 = vadd.f32 %v1113, %v1130
        %v1132 = vpop.f32.mrf.mxu0
        %v1133 = vadd.f32 %v1115, %v1132
        %1134 = vmatmul.bf16.gmra.mxu0 %v329
        %v1135 = vpop.f32.mrf.mxu0
        %v1136 = vadd.f32 %v1118, %v1135
        %v1137 = vpop.f32.mrf.mxu0
        %1138 = vdwg.mxu0
        %1139 = vmatpush.bf16.msra.mxu0 0
        %1140 = vmatpush.bf16.msra.mxu0 0
        %1141 = vmatpush.bf16.msra.mxu0 0
        %1142 = vmatpush.bf16.msra.mxu0 0
        %1143 = vmatpush.bf16.msra.mxu0 0
        %1144 = vmatpush.bf16.msra.mxu0 %v1080
        %1145 = vmatpush.bf16.msra.mxu0 %v1023
        %1146 = vmatpush.bf16.msra.mxu0 %v1021
        %1147 = vmatmul.bf16.gmra.mxu0 %v604
        %v1148 = vpop.f32.mrf.mxu0
        %v1149 = vadd.f32 %v1131, %v1148
        %v1150 = vpop.f32.mrf.mxu0
        %v1151 = vadd.f32 %v1133, %v1150
        %1152 = vmatmul.bf16.gmra.mxu0 %v607
        %v1153 = vpop.f32.mrf.mxu0
        %v1154 = vadd.f32 %v1136, %v1153
        %v1155 = vpop.f32.mrf.mxu0
        %1156 = vdwg.mxu0
        %1157 = vmatpush.bf16.msra.mxu0 %v988
        %1158 = vmatpush.bf16.msra.mxu0 %v986
        %1159 = vmatpush.bf16.msra.mxu0 %v984
        %1160 = vmatpush.bf16.msra.mxu0 %v982
        %1161 = vmatpush.bf16.msra.mxu0 %v980
        %1162 = vmatpush.bf16.msra.mxu0 %v978
        %1163 = vmatpush.bf16.msra.mxu0 %v976
        %1164 = vmatpush.bf16.msra.mxu0 %v974
        %1165 = vmatmul.bf16.gmra.mxu0 %v323
        %v1166 = vpop.f32.mrf.mxu0
        %v1167 = vadd.f32 0.0, %v1166
        %v1168 = vpop.f32.mrf.mxu0
        %v1169 = vadd.f32 0.0, %v1168
        %1170 = vmatmul.bf16.gmra.mxu0 %v327
        %v1171 = vpop.f32.mrf.mxu0
        %v1172 = vadd.f32 0.0, %v1171
        %v1173 = vpop.f32.mrf.mxu0
        %1174 = vdwg.mxu0
        %1175 = vmatpush.bf16.msra.mxu0 %v1004
        %1176 = vmatpush.bf16.msra.mxu0 %v1002
        %1177 = vmatpush.bf16.msra.mxu0 %v1000
        %1178 = vmatpush.bf16.msra.mxu0 %v998
        %1179 = vmatpush.bf16.msra.mxu0 %v996
        %1180 = vmatpush.bf16.msra.mxu0 %v994
        %1181 = vmatpush.bf16.msra.mxu0 %v992
        %1182 = vmatpush.bf16.msra.mxu0 %v990
        %1183 = vmatmul.bf16.gmra.mxu0 %v324
        %v1184 = vpop.f32.mrf.mxu0
        %v1185 = vadd.f32 %v1167, %v1184
        %v1186 = vpop.f32.mrf.mxu0
        %v1187 = vadd.f32 %v1169, %v1186
        %1188 = vmatmul.bf16.gmra.mxu0 %v328
        %v1189 = vpop.f32.mrf.mxu0
        %v1190 = vadd.f32 %v1172, %v1189
        %v1191 = vpop.f32.mrf.mxu0
        %1192 = vdwg.mxu0
        %1193 = vmatpush.bf16.msra.mxu0 %v1020
        %1194 = vmatpush.bf16.msra.mxu0 %v1018
        %1195 = vmatpush.bf16.msra.mxu0 %v1016
        %1196 = vmatpush.bf16.msra.mxu0 %v1014
        %1197 = vmatpush.bf16.msra.mxu0 %v1012
        %1198 = vmatpush.bf16.msra.mxu0 %v1010
        %1199 = vmatpush.bf16.msra.mxu0 %v1008
        %1200 = vmatpush.bf16.msra.mxu0 %v1006
        %1201 = vmatmul.bf16.gmra.mxu0 %v325
        %v1202 = vpop.f32.mrf.mxu0
        %v1203 = vadd.f32 %v1185, %v1202
        %v1204 = vpop.f32.mrf.mxu0
        %v1205 = vadd.f32 %v1187, %v1204
        %1206 = vmatmul.bf16.gmra.mxu0 %v329
        %v1207 = vpop.f32.mrf.mxu0
        %v1208 = vadd.f32 %v1190, %v1207
        %v1209 = vpop.f32.mrf.mxu0
        %1210 = vdwg.mxu0
        %1211 = vmatpush.bf16.msra.mxu0 0
        %1212 = vmatpush.bf16.msra.mxu0 0
        %1213 = vmatpush.bf16.msra.mxu0 0
        %1214 = vmatpush.bf16.msra.mxu0 0
        %1215 = vmatpush.bf16.msra.mxu0 0
        %1216 = vmatpush.bf16.msra.mxu0 %v1083
        %1217 = vmatpush.bf16.msra.mxu0 %v1024
        %1218 = vmatpush.bf16.msra.mxu0 %v1022
        %1219 = vmatmul.bf16.gmra.mxu0 %v604
        %v1220 = vpop.f32.mrf.mxu0
        %v1221 = vadd.f32 %v1203, %v1220
        %v1222 = vpop.f32.mrf.mxu0
        %v1223 = vadd.f32 %v1205, %v1222
        %1224 = vmatmul.bf16.gmra.mxu0 %v607
        %v1225 = vpop.f32.mrf.mxu0
        %v1226 = vadd.f32 %v1208, %v1225
        %v1227 = vpop.f32.mrf.mxu0
        %1228 = vdwg.mxu0
        %v1229 = vmax.f32 %v680, %v1149
        %v1230 = vmax.f32 %v752, %v1221
        %v1231 = vmax.f32 %v682, %v1151
        %v1232 = vmax.f32 %v754, %v1223
        %v1233 = vmax.f32 %v685, %v1154
        %v1234 = vmax.f32 %v757, %v1226
        %s1235 = scalar_lea.vmem %s205, 48 [#allocation2]
        %v1236 = vld [vmem:[%s1235] sm:$0xff]
        %v1237 = vld [vmem:[%s1235 + $0x8] sm:$0xff]
        %v1238 = vld [vmem:[%s1235 + $0x10] sm:$0xff]
        %v1239 = vld [vmem:[%s1235 + $0x18] sm:$0xff]
        %v1240 = vld [vmem:[%s1235 + $0x20] sm:$0x33]
        %v1241 = vld [vmem:[%s1235 + $0x28] sm:$0x33]
        %v1248 = vunpack.c.l.b16 %v1236
        %v1249 = vunpack.c.h.b16 %v1236
        %v1250 = vunpack.c.l.b16 %v1237
        %v1251 = vunpack.c.h.b16 %v1237
        %v1252 = vunpack.c.l.b16 %v1238
        %v1253 = vunpack.c.h.b16 %v1238
        %v1254 = vunpack.c.l.b16 %v1239
        %v1255 = vunpack.c.h.b16 %v1239
        %v1256 = vunpack.c.l.b16 %v1240
        %v1257 = vunpack.c.h.b16 %v1240
        %v1258 = vunpack.c.l.b16 %v1241
        %v1259 = vunpack.c.h.b16 %v1241
        %v1260 = vpack.c.b16 %v1252, %v1248
        %v1261 = vpack.c.b16 %v1253, %v1249
        %v1262 = vpack.c.b16 %v1254, %v1250
        %v1263 = vpack.c.b16 %v1255, %v1251
        %v1264 = vpack.c.b16 %v1256, %v1256
        %v1265 = vpack.c.b16 %v1257, %v1257
        %v1266 = vpack.c.b16 %v1258, %v1258
        %v1267 = vpack.c.b16 %v1259, %v1259
        %v1275 = vsel %vm602, %v1263, 0
        %v1278 = vsel %vm602, %v1267, 0
        %1280 = vmatpush.bf16.msra.mxu0 %v510
        %1281 = vmatpush.bf16.msra.mxu0 %v508
        %1282 = vmatpush.bf16.msra.mxu0 %v506
        %1283 = vmatpush.bf16.msra.mxu0 %v504
        %1284 = vmatpush.bf16.msra.mxu0 %v502
        %1285 = vmatpush.bf16.msra.mxu0 %v500
        %1286 = vmatpush.bf16.msra.mxu0 %v498
        %1287 = vmatpush.bf16.msra.mxu0 %v496
        %1288 = vmatmul.bf16.gmra.mxu0 %v1260
        %v1289 = vpop.f32.mrf.mxu0
        %v1290 = vadd.f32 0.0, %v1289
        %v1291 = vpop.f32.mrf.mxu0
        %v1292 = vadd.f32 0.0, %v1291
        %1293 = vmatmul.bf16.gmra.mxu0 %v1264
        %v1294 = vpop.f32.mrf.mxu0
        %v1295 = vadd.f32 0.0, %v1294
        %v1296 = vpop.f32.mrf.mxu0
        %1297 = vdwg.mxu0
        %1298 = vmatpush.bf16.msra.mxu0 %v526
        %1299 = vmatpush.bf16.msra.mxu0 %v524
        %1300 = vmatpush.bf16.msra.mxu0 %v522
        %1301 = vmatpush.bf16.msra.mxu0 %v520
        %1302 = vmatpush.bf16.msra.mxu0 %v518
        %1303 = vmatpush.bf16.msra.mxu0 %v516
        %1304 = vmatpush.bf16.msra.mxu0 %v514
        %1305 = vmatpush.bf16.msra.mxu0 %v512
        %1306 = vmatmul.bf16.gmra.mxu0 %v1261
        %v1307 = vpop.f32.mrf.mxu0
        %v1308 = vadd.f32 %v1290, %v1307
        %v1309 = vpop.f32.mrf.mxu0
        %v1310 = vadd.f32 %v1292, %v1309
        %1311 = vmatmul.bf16.gmra.mxu0 %v1265
        %v1312 = vpop.f32.mrf.mxu0
        %v1313 = vadd.f32 %v1295, %v1312
        %v1314 = vpop.f32.mrf.mxu0
        %1315 = vdwg.mxu0
        %1316 = vmatpush.bf16.msra.mxu0 %v542
        %1317 = vmatpush.bf16.msra.mxu0 %v540
        %1318 = vmatpush.bf16.msra.mxu0 %v538
        %1319 = vmatpush.bf16.msra.mxu0 %v536
        %1320 = vmatpush.bf16.msra.mxu0 %v534
        %1321 = vmatpush.bf16.msra.mxu0 %v532
        %1322 = vmatpush.bf16.msra.mxu0 %v530
        %1323 = vmatpush.bf16.msra.mxu0 %v528
        %1324 = vmatmul.bf16.gmra.mxu0 %v1262
        %v1325 = vpop.f32.mrf.mxu0
        %v1326 = vadd.f32 %v1308, %v1325
        %v1327 = vpop.f32.mrf.mxu0
        %v1328 = vadd.f32 %v1310, %v1327
        %1329 = vmatmul.bf16.gmra.mxu0 %v1266
        %v1330 = vpop.f32.mrf.mxu0
        %v1331 = vadd.f32 %v1313, %v1330
        %v1332 = vpop.f32.mrf.mxu0
        %1333 = vdwg.mxu0
        %1334 = vmatpush.bf16.msra.mxu0 0
        %1335 = vmatpush.bf16.msra.mxu0 0
        %1336 = vmatpush.bf16.msra.mxu0 0
        %1337 = vmatpush.bf16.msra.mxu0 0
        %1338 = vmatpush.bf16.msra.mxu0 0
        %1339 = vmatpush.bf16.msra.mxu0 %v611
        %1340 = vmatpush.bf16.msra.mxu0 %v546
        %1341 = vmatpush.bf16.msra.mxu0 %v544
        %1342 = vmatmul.bf16.gmra.mxu0 %v1275
        %v1343 = vpop.f32.mrf.mxu0
        %v1344 = vadd.f32 %v1326, %v1343
        %v1345 = vpop.f32.mrf.mxu0
        %v1346 = vadd.f32 %v1328, %v1345
        %1347 = vmatmul.bf16.gmra.mxu0 %v1278
        %v1348 = vpop.f32.mrf.mxu0
        %v1349 = vadd.f32 %v1331, %v1348
        %v1350 = vpop.f32.mrf.mxu0
        %1351 = vdwg.mxu0
        %1352 = vmatpush.bf16.msra.mxu0 %v511
        %1353 = vmatpush.bf16.msra.mxu0 %v509
        %1354 = vmatpush.bf16.msra.mxu0 %v507
        %1355 = vmatpush.bf16.msra.mxu0 %v505
        %1356 = vmatpush.bf16.msra.mxu0 %v503
        %1357 = vmatpush.bf16.msra.mxu0 %v501
        %1358 = vmatpush.bf16.msra.mxu0 %v499
        %1359 = vmatpush.bf16.msra.mxu0 %v497
        %1360 = vmatmul.bf16.gmra.mxu0 %v1260
        %v1361 = vpop.f32.mrf.mxu0
        %v1362 = vadd.f32 0.0, %v1361
        %v1363 = vpop.f32.mrf.mxu0
        %v1364 = vadd.f32 0.0, %v1363
        %1365 = vmatmul.bf16.gmra.mxu0 %v1264
        %v1366 = vpop.f32.mrf.mxu0
        %v1367 = vadd.f32 0.0, %v1366
        %v1368 = vpop.f32.mrf.mxu0
        %1369 = vdwg.mxu0
        %1370 = vmatpush.bf16.msra.mxu0 %v527
        %1371 = vmatpush.bf16.msra.mxu0 %v525
        %1372 = vmatpush.bf16.msra.mxu0 %v523
        %1373 = vmatpush.bf16.msra.mxu0 %v521
        %1374 = vmatpush.bf16.msra.mxu0 %v519
        %1375 = vmatpush.bf16.msra.mxu0 %v517
        %1376 = vmatpush.bf16.msra.mxu0 %v515
        %1377 = vmatpush.bf16.msra.mxu0 %v513
        %1378 = vmatmul.bf16.gmra.mxu0 %v1261
        %v1379 = vpop.f32.mrf.mxu0
        %v1380 = vadd.f32 %v1362, %v1379
        %v1381 = vpop.f32.mrf.mxu0
        %v1382 = vadd.f32 %v1364, %v1381
        %1383 = vmatmul.bf16.gmra.mxu0 %v1265
        %v1384 = vpop.f32.mrf.mxu0
        %v1385 = vadd.f32 %v1367, %v1384
        %v1386 = vpop.f32.mrf.mxu0
        %1387 = vdwg.mxu0
        %1388 = vmatpush.bf16.msra.mxu0 %v543
        %1389 = vmatpush.bf16.msra.mxu0 %v541
        %1390 = vmatpush.bf16.msra.mxu0 %v539
        %1391 = vmatpush.bf16.msra.mxu0 %v537
        %1392 = vmatpush.bf16.msra.mxu0 %v535
        %1393 = vmatpush.bf16.msra.mxu0 %v533
        %1394 = vmatpush.bf16.msra.mxu0 %v531
        %1395 = vmatpush.bf16.msra.mxu0 %v529
        %1396 = vmatmul.bf16.gmra.mxu0 %v1262
        %v1397 = vpop.f32.mrf.mxu0
        %v1398 = vadd.f32 %v1380, %v1397
        %v1399 = vpop.f32.mrf.mxu0
        %v1400 = vadd.f32 %v1382, %v1399
        %1401 = vmatmul.bf16.gmra.mxu0 %v1266
        %v1402 = vpop.f32.mrf.mxu0
        %v1403 = vadd.f32 %v1385, %v1402
        %v1404 = vpop.f32.mrf.mxu0
        %1405 = vdwg.mxu0
        %1406 = vmatpush.bf16.msra.mxu0 0
        %1407 = vmatpush.bf16.msra.mxu0 0
        %1408 = vmatpush.bf16.msra.mxu0 0
        %1409 = vmatpush.bf16.msra.mxu0 0
        %1410 = vmatpush.bf16.msra.mxu0 0
        %1411 = vmatpush.bf16.msra.mxu0 %v614
        %1412 = vmatpush.bf16.msra.mxu0 %v547
        %1413 = vmatpush.bf16.msra.mxu0 %v545
        %1414 = vmatmul.bf16.gmra.mxu0 %v1275
        %v1415 = vpop.f32.mrf.mxu0
        %v1416 = vadd.f32 %v1398, %v1415
        %v1417 = vpop.f32.mrf.mxu0
        %v1418 = vadd.f32 %v1400, %v1417
        %1419 = vmatmul.bf16.gmra.mxu0 %v1278
        %v1420 = vpop.f32.mrf.mxu0
        %v1421 = vadd.f32 %v1403, %v1420
        %v1422 = vpop.f32.mrf.mxu0
        %1423 = vdwg.mxu0
        %v1424 = vmax.f32 %v1229, %v1344
        %v1425 = vmax.f32 %v1230, %v1416
        %v1426 = vmax.f32 %v1231, %v1346
        %v1427 = vmax.f32 %v1232, %v1418
        %v1428 = vmax.f32 %v1233, %v1349
        %v1429 = vmax.f32 %v1234, %v1421
        %1430 = vmatpush.bf16.msra.mxu0 %v987
        %1431 = vmatpush.bf16.msra.mxu0 %v985
        %1432 = vmatpush.bf16.msra.mxu0 %v983
        %1433 = vmatpush.bf16.msra.mxu0 %v981
        %1434 = vmatpush.bf16.msra.mxu0 %v979
        %1435 = vmatpush.bf16.msra.mxu0 %v977
        %1436 = vmatpush.bf16.msra.mxu0 %v975
        %1437 = vmatpush.bf16.msra.mxu0 %v973
        %1438 = vmatmul.bf16.gmra.mxu0 %v1260
        %v1439 = vpop.f32.mrf.mxu0
        %v1440 = vadd.f32 0.0, %v1439
        %v1441 = vpop.f32.mrf.mxu0
        %v1442 = vadd.f32 0.0, %v1441
        %1443 = vmatmul.bf16.gmra.mxu0 %v1264
        %v1444 = vpop.f32.mrf.mxu0
        %v1445 = vadd.f32 0.0, %v1444
        %v1446 = vpop.f32.mrf.mxu0
        %1447 = vdwg.mxu0
        %1448 = vmatpush.bf16.msra.mxu0 %v1003
        %1449 = vmatpush.bf16.msra.mxu0 %v1001
        %1450 = vmatpush.bf16.msra.mxu0 %v999
        %1451 = vmatpush.bf16.msra.mxu0 %v997
        %1452 = vmatpush.bf16.msra.mxu0 %v995
        %1453 = vmatpush.bf16.msra.mxu0 %v993
        %1454 = vmatpush.bf16.msra.mxu0 %v991
        %1455 = vmatpush.bf16.msra.mxu0 %v989
        %1456 = vmatmul.bf16.gmra.mxu0 %v1261
        %v1457 = vpop.f32.mrf.mxu0
        %v1458 = vadd.f32 %v1440, %v1457
        %v1459 = vpop.f32.mrf.mxu0
        %v1460 = vadd.f32 %v1442, %v1459
        %1461 = vmatmul.bf16.gmra.mxu0 %v1265
        %v1462 = vpop.f32.mrf.mxu0
        %v1463 = vadd.f32 %v1445, %v1462
        %v1464 = vpop.f32.mrf.mxu0
        %1465 = vdwg.mxu0
        %1466 = vmatpush.bf16.msra.mxu0 %v1019
        %1467 = vmatpush.bf16.msra.mxu0 %v1017
        %1468 = vmatpush.bf16.msra.mxu0 %v1015
        %1469 = vmatpush.bf16.msra.mxu0 %v1013
        %1470 = vmatpush.bf16.msra.mxu0 %v1011
        %1471 = vmatpush.bf16.msra.mxu0 %v1009
        %1472 = vmatpush.bf16.msra.mxu0 %v1007
        %1473 = vmatpush.bf16.msra.mxu0 %v1005
        %1474 = vmatmul.bf16.gmra.mxu0 %v1262
        %v1475 = vpop.f32.mrf.mxu0
        %v1476 = vadd.f32 %v1458, %v1475
        %v1477 = vpop.f32.mrf.mxu0
        %v1478 = vadd.f32 %v1460, %v1477
        %1479 = vmatmul.bf16.gmra.mxu0 %v1266
        %v1480 = vpop.f32.mrf.mxu0
        %v1481 = vadd.f32 %v1463, %v1480
        %v1482 = vpop.f32.mrf.mxu0
        %1483 = vdwg.mxu0
        %1484 = vmatpush.bf16.msra.mxu0 0
        %1485 = vmatpush.bf16.msra.mxu0 0
        %1486 = vmatpush.bf16.msra.mxu0 0
        %1487 = vmatpush.bf16.msra.mxu0 0
        %1488 = vmatpush.bf16.msra.mxu0 0
        %1489 = vmatpush.bf16.msra.mxu0 %v1080
        %1490 = vmatpush.bf16.msra.mxu0 %v1023
        %1491 = vmatpush.bf16.msra.mxu0 %v1021
        %1492 = vmatmul.bf16.gmra.mxu0 %v1275
        %v1493 = vpop.f32.mrf.mxu0
        %v1494 = vadd.f32 %v1476, %v1493
        %v1495 = vpop.f32.mrf.mxu0
        %v1496 = vadd.f32 %v1478, %v1495
        %1497 = vmatmul.bf16.gmra.mxu0 %v1278
        %v1498 = vpop.f32.mrf.mxu0
        %v1499 = vadd.f32 %v1481, %v1498
        %v1500 = vpop.f32.mrf.mxu0
        %1501 = vdwg.mxu0
        %1502 = vmatpush.bf16.msra.mxu0 %v988
        %1503 = vmatpush.bf16.msra.mxu0 %v986
        %1504 = vmatpush.bf16.msra.mxu0 %v984
        %1505 = vmatpush.bf16.msra.mxu0 %v982
        %1506 = vmatpush.bf16.msra.mxu0 %v980
        %1507 = vmatpush.bf16.msra.mxu0 %v978
        %1508 = vmatpush.bf16.msra.mxu0 %v976
        %1509 = vmatpush.bf16.msra.mxu0 %v974
        %1510 = vmatmul.bf16.gmra.mxu0 %v1260
        %v1511 = vpop.f32.mrf.mxu0
        %v1512 = vadd.f32 0.0, %v1511
        %v1513 = vpop.f32.mrf.mxu0
        %v1514 = vadd.f32 0.0, %v1513
        %1515 = vmatmul.bf16.gmra.mxu0 %v1264
        %v1516 = vpop.f32.mrf.mxu0
        %v1517 = vadd.f32 0.0, %v1516
        %v1518 = vpop.f32.mrf.mxu0
        %1519 = vdwg.mxu0
        %1520 = vmatpush.bf16.msra.mxu0 %v1004
        %1521 = vmatpush.bf16.msra.mxu0 %v1002
        %1522 = vmatpush.bf16.msra.mxu0 %v1000
        %1523 = vmatpush.bf16.msra.mxu0 %v998
        %1524 = vmatpush.bf16.msra.mxu0 %v996
        %1525 = vmatpush.bf16.msra.mxu0 %v994
        %1526 = vmatpush.bf16.msra.mxu0 %v992
        %1527 = vmatpush.bf16.msra.mxu0 %v990
        %1528 = vmatmul.bf16.gmra.mxu0 %v1261
        %v1529 = vpop.f32.mrf.mxu0
        %v1530 = vadd.f32 %v1512, %v1529
        %v1531 = vpop.f32.mrf.mxu0
        %v1532 = vadd.f32 %v1514, %v1531
        %1533 = vmatmul.bf16.gmra.mxu0 %v1265
        %v1534 = vpop.f32.mrf.mxu0
        %v1535 = vadd.f32 %v1517, %v1534
        %v1536 = vpop.f32.mrf.mxu0
        %1537 = vdwg.mxu0
        %1538 = vmatpush.bf16.msra.mxu0 %v1020
        %1539 = vmatpush.bf16.msra.mxu0 %v1018
        %1540 = vmatpush.bf16.msra.mxu0 %v1016
        %1541 = vmatpush.bf16.msra.mxu0 %v1014
        %1542 = vmatpush.bf16.msra.mxu0 %v1012
        %1543 = vmatpush.bf16.msra.mxu0 %v1010
        %1544 = vmatpush.bf16.msra.mxu0 %v1008
        %1545 = vmatpush.bf16.msra.mxu0 %v1006
        %1546 = vmatmul.bf16.gmra.mxu0 %v1262
        %v1547 = vpop.f32.mrf.mxu0
        %v1548 = vadd.f32 %v1530, %v1547
        %v1549 = vpop.f32.mrf.mxu0
        %v1550 = vadd.f32 %v1532, %v1549
        %1551 = vmatmul.bf16.gmra.mxu0 %v1266
        %v1552 = vpop.f32.mrf.mxu0
        %v1553 = vadd.f32 %v1535, %v1552
        %v1554 = vpop.f32.mrf.mxu0
        %1555 = vdwg.mxu0
        %1556 = vmatpush.bf16.msra.mxu0 0
        %1557 = vmatpush.bf16.msra.mxu0 0
        %1558 = vmatpush.bf16.msra.mxu0 0
        %1559 = vmatpush.bf16.msra.mxu0 0
        %1560 = vmatpush.bf16.msra.mxu0 0
        %1561 = vmatpush.bf16.msra.mxu0 %v1083
        %1562 = vmatpush.bf16.msra.mxu0 %v1024
        %1563 = vmatpush.bf16.msra.mxu0 %v1022
        %1564 = vmatmul.bf16.gmra.mxu0 %v1275
        %v1565 = vpop.f32.mrf.mxu0
        %v1566 = vadd.f32 %v1548, %v1565
        %v1567 = vpop.f32.mrf.mxu0
        %v1568 = vadd.f32 %v1550, %v1567
        %1569 = vmatmul.bf16.gmra.mxu0 %v1278
        %v1570 = vpop.f32.mrf.mxu0
        %v1571 = vadd.f32 %v1553, %v1570
        %v1572 = vpop.f32.mrf.mxu0
        %1573 = vdwg.mxu0
        %v1574 = vmax.f32 %v1424, %v1494
        %v1575 = vmax.f32 %v1425, %v1566
        %v1576 = vmax.f32 %v1426, %v1496
        %v1577 = vmax.f32 %v1427, %v1568
        %v1578 = vmax.f32 %v1428, %v1499
        %v1579 = vmax.f32 %v1429, %v1571
        %v1580 = vadd.f32 %v1574, %v242
        %v1581 = vadd.f32 %v1575, %v243
        %v1582 = vadd.f32 %v1576, %v242
        %v1583 = vadd.f32 %v1577, %v243
        %v1584 = vadd.f32 %v1578, %v242
        %v1585 = vadd.f32 %v1579, %v243
        %v1586 = vmax.f32 %v1580, 0.0
        %v1587 = vmax.f32 %v1581, 0.0
        %v1588 = vmax.f32 %v1582, 0.0
        %v1589 = vmax.f32 %v1583, 0.0
        %v1590 = vmax.f32 %v1584, 0.0
        %v1591 = vmax.f32 %v1585, 0.0
        %v1592 = vpack.c.bf16 %v1587, %v1586
        %v1593 = vpack.c.bf16 %v1589, %v1588
        %v1594 = vpack.c.bf16 %v1591, %v1590
        %1595 = vst [vmem:[%s238] sm:$0xff] %v1592
        %1596 = vst [vmem:[%s238 + $0x8] sm:$0xff] %v1593
        %vm1597 = vcmask 1041408
        %vm1598 = vsmask.f32 1280
        %vm1599 = vmand %vm1597, %vm1598
        %vm1600 = vcmask 1045508
        %vm1601 = vsmask.f32 5376
        %vm1602 = vmand %vm1600, %vm1601
        %vm1603 = vmor %vm1602, %vm1599
        %v1604 = vld [vmem:[%s238 + $0x10] sm:$0x33]
        %v1605 = vsel %vm1603, %v1594, %v1604
        %1606 = vst [vmem:[%s238 + $0x10] sm:$0x33] %v1605
        %p1607 = scmp.lt.s32.totalorder %s18, 0
        %s1608 = scalar_select %p1607, %s18, 0
        %p1609 = scmp.lt.s32.totalorder %s19, 1
        %s1610 = scalar_select %p1609, %s19, 1
        %s1611 = smul.addr %s1610, 6
        %s1612 = smul.addr %s1608, 12
        %s1613 = sadd.s32 %s1611, %s1612
        %s1614 = smul.addr %s1613, 4
        %s1615 = scalar_lea.vmem %s3, %s1614
        // Predicated region
        $region56: #{tpu_custom_call.1} parent=50 // pred_check
          %p1616 = pneg %p116
        $region57: #{tpu_custom_call.1} parent=50 // pred_check_branch
          %1618 = sbr.rel (%p1616) target = $region59
        $region58: #{tpu_custom_call.1} parent=50 // pred_region
          _
        $region59: #{tpu_custom_call.1} parent=50 // pred_fallthru
          _
      $region51: #{tpu_custom_call.1} parent=5 // pred_fallthru
        _
      %p1619 = scmp.le.s32.totalorder 2, %s9
      // Predicated region
      $region60: #{tpu_custom_call.1} parent=5 // pred_check
        %p1620 = pneg %p1619
      $region61: #{tpu_custom_call.1} parent=5 // pred_check_branch
        %1622 = sbr.rel (%p1620) target = $region63
      $region62: #{tpu_custom_call.1} parent=5 // pred_region
        %s1623 = ssub.s32 %s9, 2
        // Predicated region
        $region64: #{tpu_custom_call.1} parent=62 // pred_check
          %p1624 = pneg %p122
        $region65: #{tpu_custom_call.1} parent=62 // pred_check_branch
          %1626 = sbr.rel (%p1624) target = $region67
        $region66: #{tpu_custom_call.1} parent=62 // pred_region
          %p1627 = scmp.lt.s32.totalorder %s20, 0
          %s1628 = scalar_select %p1627, %s20, 0
          %p1629 = scmp.lt.s32.totalorder %s21, 1
          %s1630 = scalar_select %p1629, %s21, 1
          %s1631 = smul.addr %s1630, 6
          %s1632 = smul.addr %s1628, 12
          %s1633 = sadd.s32 %s1631, %s1632
          %s1634 = smul.addr %s1633, 4
          %s1635 = scalar_lea.vmem %s3, %s1634
        $region67: #{tpu_custom_call.1} parent=62 // pred_fallthru
          _
      $region63: #{tpu_custom_call.1} parent=5 // pred_fallthru
        _
    $region6: #{tpu_custom_call.1} parent=1 // loop_footer
      %s13 = sadd.s32 1, %s9
    $region7: #{tpu_custom_call.1} parent=1 // loop_footer_branch
      %8 = sbr.rel target = $region3
    $region8: #{tpu_custom_call.1} parent=1 // loop_exit
      _

</llo_original>
